<compile_context>
chip_gen: v7x
topology: tpu7x:2x2x1
jax: 0.10.0
libtpu: 0.0.40
codegen_flags: <defaults>
</compile_context>

<pallas_src>
import functools
import math

import jax
import jax.numpy as jnp
import numpy as np
from jax.experimental import pallas as pl
from jax.experimental.pallas import tpu as pltpu


# --------------------------------------------------------------------------- #
# Pass 1: convolution (banded matmuls) + per-lane BatchNorm partial statistics #
# --------------------------------------------------------------------------- #
def conv_stats_kernel(xp_ref, wb_ref, y_ref, stats_ref, *, H, K):
    """One batch element.

    xp_ref    : (Hp, Cin*Wp)        padded input rows, lane = ci*Wp + w
    wb_ref    : (K, Cin*Wp, Cout*W) banded conv weights, col lane = co*W + w
    y_ref     : (H, Cout*W)         conv output rows,  lane = co*W + w
    stats_ref : (2, Cout*W)         [0] = sum over rows, [1] = sum of squares
    """
    acc = jnp.dot(xp_ref[0:H, :], wb_ref[0],
                  preferred_element_type=jnp.float32,
                  precision=jax.lax.Precision.HIGHEST)
    for dy in range(1, K):  # static unroll: K-1 more MXU pushes, sublane-shifted LHS
        acc = acc + jnp.dot(xp_ref[dy:dy + H, :], wb_ref[dy],
                            preferred_element_type=jnp.float32,
                            precision=jax.lax.Precision.HIGHEST)
    y_ref[...] = acc
    stats_ref[0:1, :] = jnp.sum(acc, axis=0, keepdims=True)
    stats_ref[1:2, :] = jnp.sum(acc * acc, axis=0, keepdims=True)


# --------------------------------------------------------------------------- #
# Pass 2: BatchNorm affine (single FMA) + channel concat via direct stores     #
# --------------------------------------------------------------------------- #
def bn_concat_kernel(x_ref, y_ref, scale_ref, shift_ref, out_ref, *, CinW):
    """x_ref: (TH, Cin*W)  y_ref: (TH, Cout*W)  scale/shift: (1, Cout*W)
    out_ref: (TH, (Cin+Cout)*W) — lanes [0, Cin*W) = x, lanes [Cin*W, ...) = bn."""
    out_ref[:, :CinW] = x_ref[...]
    out_ref[:, CinW:] = y_ref[...] * scale_ref[...] + shift_ref[...]


def _banded_weight(weight_oihw, W, Wp, K):
    """wb[dy, ci*Wp + wp, co*W + w] = weight[co, ci, dy, wp - w] for 0 <= wp-w < K."""
    Cout, Cin = weight_oihw.shape[0], weight_oihw.shape[1]
    w_t = jnp.transpose(weight_oihw, (1, 2, 3, 0))            # (Cin, K, K, Cout)
    dx = jnp.arange(Wp)[:, None] - jnp.arange(W)[None, :]      # (Wp, W)
    valid = (dx >= 0) & (dx < K)
    taps = w_t[:, :, jnp.clip(dx, 0, K - 1), :]                # (Cin, K, Wp, W, Cout)
    taps = jnp.where(valid[None, None, :, :, None], taps, 0.0)
    wb = jnp.transpose(taps, (1, 0, 2, 4, 3))                  # (K, Cin, Wp, Cout, W)
    return wb.reshape(K, Cin * Wp, Cout * W).astype(jnp.float32)


def enc_block_forward(x_nchw, weight_oihw, gamma, beta, eps=1e-5):
    """PyTorch-equivalent EncBlock forward; inputs/outputs are NCHW."""
    N, Cin, H, W = x_nchw.shape
    Cout, _, K, _ = weight_oihw.shape
    pad = (K - 1) // 2
    Hp, Wp = H + 2 * pad, W + 2 * pad
    CinW, CoutW, CinWp = Cin * W, Cout * W, Cin * Wp
    Ctot = Cin + Cout

    x = x_nchw.astype(jnp.float32)

    # ---- wrapper glue (layout plumbing only): pad + CW-pack rows -------------
    xpad = jnp.pad(x, ((0, 0), (0, 0), (pad, pad), (pad, pad)))
    xp_rows = jnp.transpose(xpad, (0, 2, 1, 3)).reshape(N, Hp, CinWp)
    x_rows = jnp.transpose(x, (0, 2, 1, 3)).reshape(N, H, CinW)
    wb = _banded_weight(weight_oihw.astype(jnp.float32), W, Wp, K)

    # ---- pass 1: conv + partial BN stats (pipelined / megacore over batch) ---
    p1 = functools.partial(conv_stats_kernel, H=H, K=K)
    y_rows, stats = pl.pallas_call(
        p1,
        out_shape=(jax.ShapeDtypeStruct((N, H, CoutW), jnp.float32),
                   jax.ShapeDtypeStruct((N, 2, CoutW), jnp.float32)),
        grid=(N,),
        in_specs=[
            pl.BlockSpec((None, Hp, CinWp), lambda n: (n, 0, 0)),
            pl.BlockSpec((K, CinWp, CoutW), lambda n: (0, 0, 0)),
        ],
        out_specs=(
            pl.BlockSpec((None, H, CoutW), lambda n: (n, 0, 0)),
            pl.BlockSpec((None, 2, CoutW), lambda n: (n, 0, 0)),
        ),
        compiler_params=pltpu.CompilerParams(
            dimension_semantics=("parallel",)),
    )(xp_rows, wb)

    # ---- fold GLOBAL batch stats into one per-lane FMA (tiny wrapper math) ---
    M = N * H * W
    lane_sum = jnp.sum(stats[:, 0, :], axis=0)                 # (Cout*W,)
    lane_sq = jnp.sum(stats[:, 1, :], axis=0)
    ch_sum = lane_sum.reshape(Cout, W).sum(axis=-1)            # (Cout,)
    ch_sq = lane_sq.reshape(Cout, W).sum(axis=-1)
    mean = ch_sum / M
    var = jnp.maximum(ch_sq / M - mean * mean, 0.0)            # biased train-mode var
    scale = gamma.astype(jnp.float32) * jax.lax.rsqrt(var + eps)
    shift = beta.astype(jnp.float32) - mean * scale
    scale_row = jnp.repeat(scale, W)[None, :]                  # (1, Cout*W), lane=co*W+w
    shift_row = jnp.repeat(shift, W)[None, :]

    # ---- pass 2: BN FMA + concat into 128-lane-dense output rows -------------
    TH = 8 if H % 8 == 0 else H
    p2 = functools.partial(bn_concat_kernel, CinW=CinW)
    out_rows = pl.pallas_call(
        p2,
        out_shape=jax.ShapeDtypeStruct((N, H, Ctot * W), jnp.float32),
        grid=(N, H // TH),
        in_specs=[
            pl.BlockSpec((None, TH, CinW), lambda n, t: (n, t, 0)),
            pl.BlockSpec((None, TH, CoutW), lambda n, t: (n, t, 0)),
            pl.BlockSpec((1, CoutW), lambda n, t: (0, 0)),
            pl.BlockSpec((1, CoutW), lambda n, t: (0, 0)),
        ],
        out_specs=pl.BlockSpec((None, TH, Ctot * W), lambda n, t: (n, t, 0)),
        compiler_params=pltpu.CompilerParams(
            dimension_semantics=("parallel", "parallel")),
    )(x_rows, y_rows, scale_row, shift_row)

    # ---- wrapper glue: unpack CW rows back to PyTorch NCHW -------------------
    return out_rows.reshape(N, H, Ctot, W).transpose(0, 2, 1, 3)


def reference(x_nchw, weight_oihw, gamma, beta, eps=1e-5):
    """Plain-JAX reference matching torch semantics (conv + train-mode BN + cat)."""
    conv = jax.lax.conv_general_dilated(
        x_nchw, weight_oihw, window_strides=(1, 1), padding="SAME",
        dimension_numbers=("NCHW", "OIHW", "NCHW"),
        precision=jax.lax.Precision.HIGHEST)
    mean = conv.mean(axis=(0, 2, 3), keepdims=True)
    var = ((conv - mean) ** 2).mean(axis=(0, 2, 3), keepdims=True)
    bn = (conv - mean) * jax.lax.rsqrt(var + eps) \
        * gamma.reshape(1, -1, 1, 1) + beta.reshape(1, -1, 1, 1)
    return jnp.concatenate([x_nchw, bn], axis=1)


if __name__ == "__main__":
    # EncBlock(in_planes=4, out_planes=4, kernel_size=3) at small shapes.
    N, Cin, Cout, H, W, K = 2, 4, 4, 16, 16, 3

    key = jax.random.PRNGKey(0)
    k1, k2, k3, k4 = jax.random.split(key, 4)

    x = jax.random.normal(k1, (N, Cin, H, W), dtype=jnp.float32)
    bound = 1.0 / math.sqrt(Cin * K * K)
    weight = jax.random.uniform(k2, (Cout, Cin, K, K), jnp.float32, -bound, bound)
    gamma = jax.random.uniform(k3, (Cout,), jnp.float32, 0.5, 1.5)
    beta = jax.random.uniform(k4, (Cout,), jnp.float32, -0.5, 0.5)

    out = jax.jit(enc_block_forward)(x, weight, gamma, beta)
    out = jax.block_until_ready(out)

    assert out.shape == (N, Cin + Cout, H, W), out.shape
    ref = reference(x, weight, gamma, beta)
    np.testing.assert_allclose(np.asarray(out), np.asarray(ref),
                               rtol=1e-4, atol=1e-5)
    print("KERNEL_OK")
</pallas_src>

<mosaic_0001>
module attributes {stable_mosaic.version = 11 : i64} {
  func.func @conv_stats_kernel(%arg0: i32, %arg1: memref<1x18x72xf32, #tpu.memory_space<vmem>>, %arg2: memref<3x72x64xf32, #tpu.memory_space<vmem>>, %arg3: memref<1x16x64xf32, #tpu.memory_space<vmem>>, %arg4: memref<1x2x64xf32, #tpu.memory_space<vmem>>) attributes {dimension_semantics = [#tpu.dimension_semantics<parallel>], iteration_bounds = array<i64: 2>, scalar_prefetch = 0 : i64, scratch_operands = 0 : i64, tpu.core_type = #tpu.core_type<tc>, window_params = [{transform_indices = @transform_0, window_bounds = array<i64: 1, 18, 72>}, {pipeline_mode = #tpu.pipeline_mode<synchronous>, transform_indices = @transform_1, window_bounds = array<i64: 3, 72, 64>}, {transform_indices = @transform_2, window_bounds = array<i64: 1, 16, 64>}, {transform_indices = @transform_3, window_bounds = array<i64: 1, 2, 64>}]} {
    %c0 = arith.constant 0 : index
    %c0_0 = arith.constant 0 : index
    %c0_1 = arith.constant 0 : index
    %0 = vector.load %arg1[%c0, %c0_0, %c0_1] : memref<1x18x72xf32, #tpu.memory_space<vmem>>, vector<1x16x72xf32>
    %1 = vector.shape_cast %0 : vector<1x16x72xf32> to vector<16x72xf32>
    %c0_2 = arith.constant 0 : index
    %c0_3 = arith.constant 0 : index
    %c0_4 = arith.constant 0 : index
    %2 = vector.load %arg2[%c0_2, %c0_3, %c0_4] : memref<3x72x64xf32, #tpu.memory_space<vmem>>, vector<1x72x64xf32>
    %3 = vector.shape_cast %2 : vector<1x72x64xf32> to vector<72x64xf32>
    %cst = arith.constant dense<0.000000e+00> : vector<16x64xf32>
    %4 = tpu.matmul %1, %3, %cst {dimension_numbers = #tpu.dot_dimension_numbers<[1], [0], [0], [1], [0, 0, 1, 1], [], []>, precision = #tpu.contract_precision<fp32>} : vector<16x72xf32>, vector<72x64xf32>, vector<16x64xf32> -> vector<16x64xf32>
    %c0_5 = arith.constant 0 : index
    %c1 = arith.constant 1 : index
    %c0_6 = arith.constant 0 : index
    %5 = vector.load %arg1[%c0_5, %c1, %c0_6] : memref<1x18x72xf32, #tpu.memory_space<vmem>>, vector<1x16x72xf32>
    %6 = vector.shape_cast %5 : vector<1x16x72xf32> to vector<16x72xf32>
    %c1_7 = arith.constant 1 : index
    %c0_8 = arith.constant 0 : index
    %c0_9 = arith.constant 0 : index
    %7 = vector.load %arg2[%c1_7, %c0_8, %c0_9] : memref<3x72x64xf32, #tpu.memory_space<vmem>>, vector<1x72x64xf32>
    %8 = vector.shape_cast %7 : vector<1x72x64xf32> to vector<72x64xf32>
    %cst_10 = arith.constant dense<0.000000e+00> : vector<16x64xf32>
    %9 = tpu.matmul %6, %8, %cst_10 {dimension_numbers = #tpu.dot_dimension_numbers<[1], [0], [0], [1], [0, 0, 1, 1], [], []>, precision = #tpu.contract_precision<fp32>} : vector<16x72xf32>, vector<72x64xf32>, vector<16x64xf32> -> vector<16x64xf32>
    %10 = arith.addf %4, %9 : vector<16x64xf32>
    %c0_11 = arith.constant 0 : index
    %c2 = arith.constant 2 : index
    %c0_12 = arith.constant 0 : index
    %11 = vector.load %arg1[%c0_11, %c2, %c0_12] : memref<1x18x72xf32, #tpu.memory_space<vmem>>, vector<1x16x72xf32>
    %12 = vector.shape_cast %11 : vector<1x16x72xf32> to vector<16x72xf32>
    %c2_13 = arith.constant 2 : index
    %c0_14 = arith.constant 0 : index
    %c0_15 = arith.constant 0 : index
    %13 = vector.load %arg2[%c2_13, %c0_14, %c0_15] : memref<3x72x64xf32, #tpu.memory_space<vmem>>, vector<1x72x64xf32>
    %14 = vector.shape_cast %13 : vector<1x72x64xf32> to vector<72x64xf32>
    %cst_16 = arith.constant dense<0.000000e+00> : vector<16x64xf32>
    %15 = tpu.matmul %12, %14, %cst_16 {dimension_numbers = #tpu.dot_dimension_numbers<[1], [0], [0], [1], [0, 0, 1, 1], [], []>, precision = #tpu.contract_precision<fp32>} : vector<16x72xf32>, vector<72x64xf32>, vector<16x64xf32> -> vector<16x64xf32>
    %16 = arith.addf %10, %15 : vector<16x64xf32>
    %c0_17 = arith.constant 0 : index
    %c0_18 = arith.constant 0 : index
    %c0_19 = arith.constant 0 : index
    %17 = vector.load %arg3[%c0_17, %c0_18, %c0_19] : memref<1x16x64xf32, #tpu.memory_space<vmem>>, vector<1x16x64xf32>
    %18 = vector.shape_cast %17 : vector<1x16x64xf32> to vector<16x64xf32>
    %19 = vector.shape_cast %16 : vector<16x64xf32> to vector<1x16x64xf32>
    tpu.vector_store %arg3[%c0_17, %c0_18, %c0_19], %19 {strides = array<i32>} : memref<1x16x64xf32, #tpu.memory_space<vmem>>, vector<1x16x64xf32>,
    %cst_20 = arith.constant dense<0.000000e+00> : vector<64xf32>
    %20 = vector.multi_reduction <add>, %16, %cst_20 [0] : vector<16x64xf32> to vector<64xf32>
    %21 = vector.shape_cast %20 : vector<64xf32> to vector<1x64xf32>
    %c0_21 = arith.constant 0 : index
    %c0_22 = arith.constant 0 : index
    %c0_23 = arith.constant 0 : index
    %22 = vector.load %arg4[%c0_21, %c0_22, %c0_23] : memref<1x2x64xf32, #tpu.memory_space<vmem>>, vector<1x1x64xf32>
    %23 = vector.shape_cast %22 : vector<1x1x64xf32> to vector<1x64xf32>
    %24 = vector.shape_cast %21 : vector<1x64xf32> to vector<1x1x64xf32>
    tpu.vector_store %arg4[%c0_21, %c0_22, %c0_23], %24 {strides = array<i32>} : memref<1x2x64xf32, #tpu.memory_space<vmem>>, vector<1x1x64xf32>,
    %25 = arith.mulf %16, %16 : vector<16x64xf32>
    %cst_24 = arith.constant dense<0.000000e+00> : vector<64xf32>
    %26 = vector.multi_reduction <add>, %25, %cst_24 [0] : vector<16x64xf32> to vector<64xf32>
    %27 = vector.shape_cast %26 : vector<64xf32> to vector<1x64xf32>
    %c0_25 = arith.constant 0 : index
    %c1_26 = arith.constant 1 : index
    %c0_27 = arith.constant 0 : index
    %28 = vector.load %arg4[%c0_25, %c1_26, %c0_27] : memref<1x2x64xf32, #tpu.memory_space<vmem>>, vector<1x1x64xf32>
    %29 = vector.shape_cast %28 : vector<1x1x64xf32> to vector<1x64xf32>
    %30 = vector.shape_cast %27 : vector<1x64xf32> to vector<1x1x64xf32>
    tpu.vector_store %arg4[%c0_25, %c1_26, %c0_27], %30 {strides = array<i32>} : memref<1x2x64xf32, #tpu.memory_space<vmem>>, vector<1x1x64xf32>,
    return
  }
  func.func @transform_0(%arg0: i32) -> (i32, i32, i32) {
    %c0_i32 = arith.constant 0 : i32
    %c0_i32_0 = arith.constant 0 : i32
    %c0_i32_1 = arith.constant 0 : i32
    return %arg0, %c0_i32, %c0_i32_0 : i32, i32, i32
  }
  func.func @transform_1(%arg0: i32) -> (i32, i32, i32) {
    %c0_i32 = arith.constant 0 : i32
    %c0_i32_0 = arith.constant 0 : i32
    %c0_i32_1 = arith.constant 0 : i32
    %c0_i32_2 = arith.constant 0 : i32
    return %c0_i32, %c0_i32_0, %c0_i32_1 : i32, i32, i32
  }
  func.func @transform_2(%arg0: i32) -> (i32, i32, i32) {
    %c0_i32 = arith.constant 0 : i32
    %c0_i32_0 = arith.constant 0 : i32
    %c0_i32_1 = arith.constant 0 : i32
    return %arg0, %c0_i32, %c0_i32_0 : i32, i32, i32
  }
  func.func @transform_3(%arg0: i32) -> (i32, i32, i32) {
    %c0_i32 = arith.constant 0 : i32
    %c0_i32_0 = arith.constant 0 : i32
    %c0_i32_1 = arith.constant 0 : i32
    return %arg0, %c0_i32, %c0_i32_0 : i32, i32, i32
  }
}

module attributes {stable_mosaic.version = 11 : i64} {
  func.func @bn_concat_kernel(%arg0: i32, %arg1: i32, %arg2: memref<1x8x64xf32, #tpu.memory_space<vmem>>, %arg3: memref<1x8x64xf32, #tpu.memory_space<vmem>>, %arg4: memref<1x64xf32, #tpu.memory_space<vmem>>, %arg5: memref<1x64xf32, #tpu.memory_space<vmem>>, %arg6: memref<1x8x128xf32, #tpu.memory_space<vmem>>) attributes {dimension_semantics = [#tpu.dimension_semantics<parallel>, #tpu.dimension_semantics<parallel>], iteration_bounds = array<i64: 2, 2>, scalar_prefetch = 0 : i64, scratch_operands = 0 : i64, tpu.core_type = #tpu.core_type<tc>, window_params = [{transform_indices = @transform_0, window_bounds = array<i64: 1, 8, 64>}, {transform_indices = @transform_1, window_bounds = array<i64: 1, 8, 64>}, {pipeline_mode = #tpu.pipeline_mode<synchronous>, transform_indices = @transform_2, window_bounds = array<i64: 1, 64>}, {pipeline_mode = #tpu.pipeline_mode<synchronous>, transform_indices = @transform_3, window_bounds = array<i64: 1, 64>}, {transform_indices = @transform_4, window_bounds = array<i64: 1, 8, 128>}]} {
    %c0 = arith.constant 0 : index
    %c0_0 = arith.constant 0 : index
    %c0_1 = arith.constant 0 : index
    %0 = vector.load %arg2[%c0, %c0_0, %c0_1] : memref<1x8x64xf32, #tpu.memory_space<vmem>>, vector<1x8x64xf32>
    %1 = vector.shape_cast %0 : vector<1x8x64xf32> to vector<8x64xf32>
    %c0_2 = arith.constant 0 : index
    %c0_3 = arith.constant 0 : index
    %c0_4 = arith.constant 0 : index
    %2 = vector.load %arg6[%c0_2, %c0_3, %c0_4] : memref<1x8x128xf32, #tpu.memory_space<vmem>>, vector<1x8x64xf32>
    %3 = vector.shape_cast %2 : vector<1x8x64xf32> to vector<8x64xf32>
    %4 = vector.shape_cast %1 : vector<8x64xf32> to vector<1x8x64xf32>
    tpu.vector_store %arg6[%c0_2, %c0_3, %c0_4], %4 {strides = array<i32>} : memref<1x8x128xf32, #tpu.memory_space<vmem>>, vector<1x8x64xf32>,
    %c0_5 = arith.constant 0 : index
    %c0_6 = arith.constant 0 : index
    %c0_7 = arith.constant 0 : index
    %5 = vector.load %arg3[%c0_5, %c0_6, %c0_7] : memref<1x8x64xf32, #tpu.memory_space<vmem>>, vector<1x8x64xf32>
    %6 = vector.shape_cast %5 : vector<1x8x64xf32> to vector<8x64xf32>
    %c0_8 = arith.constant 0 : index
    %c0_9 = arith.constant 0 : index
    %7 = vector.load %arg4[%c0_8, %c0_9] : memref<1x64xf32, #tpu.memory_space<vmem>>, vector<1x64xf32>
    %8 = vector.broadcast %7 : vector<1x64xf32> to vector<8x64xf32>
    %9 = arith.mulf %6, %8 : vector<8x64xf32>
    %c0_10 = arith.constant 0 : index
    %c0_11 = arith.constant 0 : index
    %10 = vector.load %arg5[%c0_10, %c0_11] : memref<1x64xf32, #tpu.memory_space<vmem>>, vector<1x64xf32>
    %11 = vector.broadcast %10 : vector<1x64xf32> to vector<8x64xf32>
    %12 = arith.addf %9, %11 : vector<8x64xf32>
    %c0_12 = arith.constant 0 : index
    %c0_13 = arith.constant 0 : index
    %c64 = arith.constant 64 : index
    %13 = vector.load %arg6[%c0_12, %c0_13, %c64] : memref<1x8x128xf32, #tpu.memory_space<vmem>>, vector<1x8x64xf32>
    %14 = vector.shape_cast %13 : vector<1x8x64xf32> to vector<8x64xf32>
    %15 = vector.shape_cast %12 : vector<8x64xf32> to vector<1x8x64xf32>
    tpu.vector_store %arg6[%c0_12, %c0_13, %c64], %15 {strides = array<i32>} : memref<1x8x128xf32, #tpu.memory_space<vmem>>, vector<1x8x64xf32>,
    return
  }
  func.func @transform_0(%arg0: i32, %arg1: i32) -> (i32, i32, i32) {
    %c0_i32 = arith.constant 0 : i32
    %c0_i32_0 = arith.constant 0 : i32
    return %arg0, %arg1, %c0_i32 : i32, i32, i32
  }
  func.func @transform_1(%arg0: i32, %arg1: i32) -> (i32, i32, i32) {
    %c0_i32 = arith.constant 0 : i32
    %c0_i32_0 = arith.constant 0 : i32
    return %arg0, %arg1, %c0_i32 : i32, i32, i32
  }
  func.func @transform_2(%arg0: i32, %arg1: i32) -> (i32, i32) {
    %c0_i32 = arith.constant 0 : i32
    %c0_i32_0 = arith.constant 0 : i32
    %c0_i32_1 = arith.constant 0 : i32
    return %c0_i32, %c0_i32_0 : i32, i32
  }
  func.func @transform_3(%arg0: i32, %arg1: i32) -> (i32, i32) {
    %c0_i32 = arith.constant 0 : i32
    %c0_i32_0 = arith.constant 0 : i32
    %c0_i32_1 = arith.constant 0 : i32
    return %c0_i32, %c0_i32_0 : i32, i32
  }
  func.func @transform_4(%arg0: i32, %arg1: i32) -> (i32, i32, i32) {
    %c0_i32 = arith.constant 0 : i32
    %c0_i32_0 = arith.constant 0 : i32
    return %arg0, %arg1, %c0_i32 : i32, i32, i32
  }
}

</mosaic_0001>

<llo_original>
// kernel: enc_block_forward.2
$region0: #{enc_block_forward.2}
  #allocation0 [shape = 'u32[]', space=smem, size = 0x4, offset = 0x4, fixed_abs, tag = 'smem constant byte address 0x4 - core index']
  #allocation1 [shape = 'u32[144,128]{1,0:T(1,128)}', space=vmem, size = 0x12000, scoped, tag = 'internal scratch']
  %s0 = inlined_call_operand.vmem [shape: f32[2,18,72], index: 0, kind: input, shape index: {}]
  %s1 = inlined_call_operand.vmem [shape: f32[3,72,64], index: 1, kind: input, shape index: {}]
  %s2 = inlined_call_operand.vmem [shape: f32[2,16,64], index: 2, kind: output, shape index: {0}]
  %s3 = inlined_call_operand.vmem [shape: f32[2,2,64], index: 3, kind: output, shape index: {1}]
  %4 = xla_tuple %s2, %s3
  %s5 = sld [smem:[#allocation0]]
  $region49: #{enc_block_forward.2} parent=0
    _
  %s7 = ssub.s32 1, %s5
  %s8 = scalar_select 0, %s7, %s5
  loop: start=0, step=1, limit=4
  $region2: #{enc_block_forward.2} parent=0 // loop_pre_header
    _
  $region3: #{enc_block_forward.2} parent=0 // loop_header
    %s10 = sphi 0, %s14
    %p11 = scmp.ge.s32.totalorder %s10, 4
    %s20 = sphi 0, %s22
    %s23 = sphi 0, %s20
    %s24 = sphi 0, %s23
    %s40 = sphi 0, %s24
    %s44 = sphi 0, %s44
    %s46 = sphi 0, %s44
    %s47 = sphi 0, %s46
    %s61 = sphi 0, %s47
    %s67 = sphi 0, %s69
    %s70 = sphi 0, %s67
    %s71 = sphi 0, %s70
    %s87 = sphi 0, %s71
    %s93 = sphi 0, %s95
    %s96 = sphi 0, %s93
    %s97 = sphi 0, %s96
    %s113 = sphi 0, %s97
  $region4: #{enc_block_forward.2} parent=0 // loop_header_branch
    %13 = sbr.rel (%p11) target = $region8
  $region5: #{enc_block_forward.2} parent=0 // loop_body
    %s15 = ssub.s32 %s10, 1
    %s16 = ssub.s32 %s10, 2
    %s17 = sadd.s32 %s10, 1
    %s18 = ssub.s32 %s10, %s17
    %p19 = scmp.eq.s32.totalorder %s18, 0
    %s21 = sadd.s32 %s20, 1
    %s22 = scalar_select %p19, %s20, %s21
    %p25 = pneg %p19
    %p26 = scmp.eq.s32.totalorder %s10, 1
    %p27 = por %p25, %p26
    %p28 = scmp.ne.s32.totalorder %s20, %s23
    %p29 = scmp.eq.s32.totalorder %s10, 0
    %p30 = por %p28, %p29
    %p31 = scmp.ne.s32.totalorder %s20, %s23
    %p32 = scmp.eq.s32.totalorder %s15, 1
    %p33 = por %p31, %p32
    %p34 = scmp.ne.s32.totalorder %s23, %s24
    %p35 = scmp.eq.s32.totalorder %s15, 0
    %p36 = por %p34, %p35
    %p37 = scmp.ne.s32.totalorder %s23, %s24
    %p38 = scmp.eq.s32.totalorder %s16, 1
    %p39 = por %p37, %p38
    %p41 = scmp.ne.s32.totalorder %s24, %s40
    %p42 = scmp.eq.s32.totalorder %s16, 0
    %p43 = por %p41, %p42
    %s45 = sadd.s32 %s44, 1
    %p48 = scmp.eq.s32.totalorder %s10, 1
    %p49 = scmp.ne.s32.totalorder %s44, %s46
    %p50 = scmp.eq.s32.totalorder %s10, 0
    %p51 = por %p49, %p50
    %p52 = scmp.ne.s32.totalorder %s44, %s46
    %p53 = scmp.eq.s32.totalorder %s15, 1
    %p54 = por %p52, %p53
    %p55 = scmp.ne.s32.totalorder %s46, %s47
    %p56 = scmp.eq.s32.totalorder %s15, 0
    %p57 = por %p55, %p56
    %p58 = scmp.ne.s32.totalorder %s46, %s47
    %p59 = scmp.eq.s32.totalorder %s16, 1
    %p60 = por %p58, %p59
    %p62 = scmp.ne.s32.totalorder %s47, %s61
    %p63 = scmp.eq.s32.totalorder %s16, 0
    %p64 = por %p62, %p63
    %s65 = ssub.s32 %s10, %s17
    %p66 = scmp.eq.s32.totalorder %s65, 0
    %s68 = sadd.s32 %s67, 1
    %s69 = scalar_select %p66, %s67, %s68
    %p72 = pneg %p66
    %p73 = scmp.eq.s32.totalorder %s10, 1
    %p74 = por %p72, %p73
    %p75 = scmp.ne.s32.totalorder %s67, %s70
    %p76 = scmp.eq.s32.totalorder %s10, 0
    %p77 = por %p75, %p76
    %p78 = scmp.ne.s32.totalorder %s67, %s70
    %p79 = scmp.eq.s32.totalorder %s15, 1
    %p80 = por %p78, %p79
    %p81 = scmp.ne.s32.totalorder %s70, %s71
    %p82 = scmp.eq.s32.totalorder %s15, 0
    %p83 = por %p81, %p82
    %p84 = scmp.ne.s32.totalorder %s70, %s71
    %p85 = scmp.eq.s32.totalorder %s16, 1
    %p86 = por %p84, %p85
    %p88 = scmp.ne.s32.totalorder %s71, %s87
    %p89 = scmp.eq.s32.totalorder %s16, 0
    %p90 = por %p88, %p89
    %s91 = ssub.s32 %s10, %s17
    %p92 = scmp.eq.s32.totalorder %s91, 0
    %s94 = sadd.s32 %s93, 1
    %s95 = scalar_select %p92, %s93, %s94
    %p98 = pneg %p92
    %p99 = scmp.eq.s32.totalorder %s10, 1
    %p100 = por %p98, %p99
    %p101 = scmp.ne.s32.totalorder %s93, %s96
    %p102 = scmp.eq.s32.totalorder %s10, 0
    %p103 = por %p101, %p102
    %p104 = scmp.ne.s32.totalorder %s93, %s96
    %p105 = scmp.eq.s32.totalorder %s15, 1
    %p106 = por %p104, %p105
    %p107 = scmp.ne.s32.totalorder %s96, %s97
    %p108 = scmp.eq.s32.totalorder %s15, 0
    %p109 = por %p107, %p108
    %p110 = scmp.ne.s32.totalorder %s96, %s97
    %p111 = scmp.eq.s32.totalorder %s16, 1
    %p112 = por %p110, %p111
    %p114 = scmp.ne.s32.totalorder %s97, %s113
    %p115 = scmp.eq.s32.totalorder %s16, 0
    %p116 = por %p114, %p115
    %p117 = scmp.le.s32.totalorder 1, %s10
    %p118 = scmp.lt.s32.totalorder %s10, 3
    %p119 = pnand %p117, %p118
    %p120 = pneg %p119
    // Predicated region
    $region9: #{enc_block_forward.2} parent=5 // pred_check
      _
    $region10: #{enc_block_forward.2} parent=5 // pred_check_branch
      %122 = sbr.rel (%p119) target = $region12
    $region11: #{enc_block_forward.2} parent=5 // pred_region
      %s123 = ssub.s32 %s10, 1
      // Predicated region
      $region13: #{enc_block_forward.2} parent=11 // pred_check
        %p124 = pneg %p57
      $region14: #{enc_block_forward.2} parent=11 // pred_check_branch
        %126 = sbr.rel (%p124) target = $region16
      $region15: #{enc_block_forward.2} parent=11 // pred_region
        _
      $region16: #{enc_block_forward.2} parent=11 // pred_fallthru
        _
    $region12: #{enc_block_forward.2} parent=5 // pred_fallthru
      _
    %p127 = scmp.lt.s32.totalorder %s10, 2
    // Predicated region
    $region17: #{enc_block_forward.2} parent=5 // pred_check
      %p128 = pneg %p127
    $region18: #{enc_block_forward.2} parent=5 // pred_check_branch
      %130 = sbr.rel (%p128) target = $region20
    $region19: #{enc_block_forward.2} parent=5 // pred_region
      // Predicated region
      $region21: #{enc_block_forward.2} parent=19 // pred_check
        %p131 = pneg %p30
      $region22: #{enc_block_forward.2} parent=19 // pred_check_branch
        %133 = sbr.rel (%p131) target = $region24
      $region23: #{enc_block_forward.2} parent=19 // pred_region
        %p134 = scmp.lt.s32.totalorder %s10, 1
        %s135 = scalar_select %p134, %s10, 1
        %s136 = smul.addr %s135, 3
        %s137 = smul.addr %s136, 8
        %s138 = scalar_lea.vmem %s0, %s137
      $region24: #{enc_block_forward.2} parent=19 // pred_fallthru
        _
    $region20: #{enc_block_forward.2} parent=5 // pred_fallthru
      _
    %p139 = scmp.le.s32.totalorder 1, %s10
    %p140 = scmp.lt.s32.totalorder %s10, 3
    %p141 = pnand %p139, %p140
    %p142 = pneg %p141
    // Predicated region
    $region25: #{enc_block_forward.2} parent=5 // pred_check
      _
    $region26: #{enc_block_forward.2} parent=5 // pred_check_branch
      %144 = sbr.rel (%p141) target = $region28
    $region27: #{enc_block_forward.2} parent=5 // pred_region
      %s145 = ssub.s32 %s10, 1
      %p146 = scmp.lt.s32.totalorder %s15, 1
      %s147 = scalar_select %p146, %s15, 1
      %s148 = smul.addr %s147, 3
      %s149 = smul.addr %s148, 8
      %s150 = scalar_lea.vmem %s0, %s149
      %p151 = pneg %p36
      %p152 = pneg %p33
      %p153 = pneg %p57
      %p154 = pneg %p54
      %p155 = pneg %p83
      %p156 = pneg %p80
      %p157 = scmp.lt.s32.totalorder %s15, 1
      %s158 = scalar_select %p157, %s15, 1
      %s159 = smul.addr %s158, 2
      %s160 = smul.addr %s159, 8
      %s161 = scalar_lea.vmem %s2, %s160
      %p162 = pneg %p109
      %p163 = pneg %p106
      %p164 = scmp.lt.s32.totalorder %s15, 1
      %s165 = scalar_select %p164, %s15, 1
      %s166 = smul.addr %s165, 2
      %s167 = scalar_lea.vmem %s3, %s166
      %p168 = scmp.lt.s32.totalorder %s15, 1
      %s169 = scalar_select %p168, %s15, 1
      %s170 = smul.addr %s169, 3
      %s171 = smul.addr %s170, 8
      %s172 = scalar_lea.vmem %s0, %s171
      %p173 = scmp.lt.s32.totalorder %s15, 1
      %s174 = scalar_select %p173, %s15, 1
      %s175 = smul.addr %s174, 2
      %s176 = smul.addr %s175, 8
      %s177 = scalar_lea.vmem %s2, %s176
      %p178 = scmp.lt.s32.totalorder %s15, 1
      %s179 = scalar_select %p178, %s15, 1
      %s180 = smul.addr %s179, 2
      %s181 = scalar_lea.vmem %s3, %s180
      %v182 = vld [vmem:[%s172] sm:$0xff]
      %v183 = vld [vmem:[%s172 + $0x8] sm:$0xff]
      %v184 = vld [vmem:[%s1] sm:$0xff]
      %v185 = vld [vmem:[%s1 + $0x8] sm:$0xff]
      %v186 = vld [vmem:[%s1 + $0x10] sm:$0xff]
      %v187 = vld [vmem:[%s1 + $0x18] sm:$0xff]
      %v188 = vld [vmem:[%s1 + $0x20] sm:$0xff]
      %v189 = vld [vmem:[%s1 + $0x28] sm:$0xff]
      %v190 = vld [vmem:[%s1 + $0x30] sm:$0xff]
      %v191 = vld [vmem:[%s1 + $0x38] sm:$0xff]
      %v192 = vld [vmem:[%s1 + $0x40] sm:$0xff]
      %v193 = vld [vmem:[%s172 + $0x1] sm:$0xff]
      %v194 = vld [vmem:[%s172 + $0x9] sm:$0xff]
      %s195 = scalar_lea.vmem %s1, 72
      %v196 = vld [vmem:[%s195] sm:$0xff]
      %v197 = vld [vmem:[%s195 + $0x8] sm:$0xff]
      %v198 = vld [vmem:[%s195 + $0x10] sm:$0xff]
      %v199 = vld [vmem:[%s195 + $0x18] sm:$0xff]
      %v200 = vld [vmem:[%s195 + $0x20] sm:$0xff]
      %v201 = vld [vmem:[%s195 + $0x28] sm:$0xff]
      %v202 = vld [vmem:[%s195 + $0x30] sm:$0xff]
      %v203 = vld [vmem:[%s195 + $0x38] sm:$0xff]
      %v204 = vld [vmem:[%s195 + $0x40] sm:$0xff]
      %vm205 = vcmask 588800
      %v207 = vsel %vm205, %v193, 0
      %v210 = vsel %vm205, %v194, 0
      %212 = vmatprep.subr.mxu0 0.0
      %v213 = vand.u32 %v196, 4294901760
      %214 = vmatpush1.msra.mxu0 %v213
      %215 = vmatprep.subr.mxu0 0.0
      %v216 = vand.u32 %v197, 4294901760
      %217 = vmatpush1.msra.mxu0 %v216
      %218 = vmatprep.subr.mxu0 0.0
      %v219 = vand.u32 %v198, 4294901760
      %220 = vmatpush1.msra.mxu0 %v219
      %221 = vmatprep.subr.mxu0 0.0
      %v222 = vand.u32 %v199, 4294901760
      %223 = vmatpush1.msra.mxu0 %v222
      %224 = vmatprep.subr.mxu0 0.0
      %v225 = vand.u32 %v200, 4294901760
      %226 = vmatpush1.msra.mxu0 %v225
      %227 = vmatprep.subr.mxu0 0.0
      %v228 = vand.u32 %v201, 4294901760
      %229 = vmatpush1.msra.mxu0 %v228
      %230 = vmatprep.subr.mxu0 0.0
      %v231 = vand.u32 %v202, 4294901760
      %232 = vmatpush1.msra.mxu0 %v231
      %233 = vmatprep.subr.mxu0 0.0
      %v234 = vand.u32 %v203, 4294901760
      %235 = vmatpush1.msra.mxu0 %v234
      %236 = vmatprep.subr.mxu0 0.0
      %v237 = vand.u32 %v204, 4294901760
      %238 = vmatpush1.msra.mxu0 %v237
      %239 = vmatprep.subr.mxu0 0.0
      %240 = vmatpush1.msra.mxu0 0.0
      %241 = vmatprep.subr.mxu0 0.0
      %242 = vmatpush1.msra.mxu0 0.0
      %243 = vmatprep.subr.mxu0 0.0
      %244 = vmatpush1.msra.mxu0 0.0
      %245 = vmatprep.subr.mxu0 0.0
      %246 = vmatpush1.msra.mxu0 0.0
      %247 = vmatprep.subr.mxu0 0.0
      %248 = vmatpush1.msra.mxu0 0.0
      %249 = vmatprep.subr.mxu0 0.0
      %250 = vmatpush1.msra.mxu0 0.0
      %251 = vmatprep.subr.mxu0 0.0
      %252 = vmatpush1.msra.mxu0 0.0
      %253 = vmatprep.subr.mxu0 0.0
      %254 = vmatpush1.msra.mxu0 0.0
      %255 = vmatprep.subr.mxu0 0.0
      %256 = vmatpush1.msra.mxu0 0.0
      %257 = vmatprep.subr.mxu0 0.0
      %258 = vmatpush1.msra.mxu0 0.0
      %259 = vmatprep.subr.mxu0 0.0
      %260 = vmatpush1.msra.mxu0 0.0
      %261 = vmatprep.subr.mxu0 0.0
      %262 = vmatpush1.msra.mxu0 0.0
      %263 = vmatprep.subr.mxu0 0.0
      %264 = vmatpush1.msra.mxu0 0.0
      %265 = vmatprep.subr.mxu0 0.0
      %266 = vmatpush1.msra.mxu0 0.0
      %267 = vmatprep.subr.mxu0 0.0
      %268 = vmatpush1.msra.mxu0 0.0
      %269 = vmatprep.subr.mxu0 0.0
      %270 = vmatpush1.msra.mxu0 0.0
      %271 = vmatprep.subr.mxu0 0.0
      %272 = vmatpush1.msra.mxu0 0.0
      %273 = vmatprep.subr.mxu0 0.0
      %274 = vmatpush1.msra.mxu0 0.0
      %275 = vmatprep.subr.mxu0 0.0
      %276 = vmatpush1.msra.mxu0 0.0
      %277 = vmatprep.subr.mxu0 0.0
      %278 = vmatpush1.msra.mxu0 0.0
      %279 = vmatprep.subr.mxu0 0.0
      %280 = vmatpush1.msra.mxu0 0.0
      %281 = vmatprep.subr.mxu0 0.0
      %282 = vmatpush1.msra.mxu0 0.0
      %283 = vmatprep.subr.mxu0 0.0
      %284 = vmatpush1.msra.mxu0 0.0
      %285 = vmatprep.mubr.f32.mxu0 0.0
      %v286 = vand.u32 %v207, 4294901760
      %v287 = vsub.f32 %v207, %v286
      %v288 = vand.u32 %v287, 4294901760
      %v289 = vsub.f32 %v287, %v288
      %v290 = vand.u32 %v289, 4294901760
      %291 = vmatmul.mubr.f32.gmra.mrb[0].mxu0 %v290
      %v292 = vpop.f32.mrb[0].mxu0
      %v293 = vadd.f32 0.0, %v292
      %v294 = vpop.f32.mrb[0].mxu0
      %295 = vmatprep.mubr.f32.mxu0 0.0
      %v296 = vand.u32 %v210, 4294901760
      %v297 = vsub.f32 %v210, %v296
      %v298 = vand.u32 %v297, 4294901760
      %v299 = vsub.f32 %v297, %v298
      %v300 = vand.u32 %v299, 4294901760
      %301 = vmatmul.mubr.f32.gmra.mrb[0].mxu0 %v300
      %v302 = vpop.f32.mrb[0].mxu0
      %v303 = vadd.f32 0.0, %v302
      %v304 = vpop.f32.mrb[0].mxu0
      %305 = vdwg.mxu0
      %306 = vmatprep.subr.mxu0 0.0
      %v307 = vand.u32 %v196, 4294901760
      %v308 = vsub.f32 %v196, %v307
      %v309 = vand.u32 %v308, 4294901760
      %v310 = vsub.f32 %v308, %v309
      %v311 = vand.u32 %v310, 4294901760
      %312 = vmatpush1.msra.mxu0 %v311
      %313 = vmatprep.subr.mxu0 0.0
      %v314 = vand.u32 %v197, 4294901760
      %v315 = vsub.f32 %v197, %v314
      %v316 = vand.u32 %v315, 4294901760
      %v317 = vsub.f32 %v315, %v316
      %v318 = vand.u32 %v317, 4294901760
      %319 = vmatpush1.msra.mxu0 %v318
      %320 = vmatprep.subr.mxu0 0.0
      %v321 = vand.u32 %v198, 4294901760
      %v322 = vsub.f32 %v198, %v321
      %v323 = vand.u32 %v322, 4294901760
      %v324 = vsub.f32 %v322, %v323
      %v325 = vand.u32 %v324, 4294901760
      %326 = vmatpush1.msra.mxu0 %v325
      %327 = vmatprep.subr.mxu0 0.0
      %v328 = vand.u32 %v199, 4294901760
      %v329 = vsub.f32 %v199, %v328
      %v330 = vand.u32 %v329, 4294901760
      %v331 = vsub.f32 %v329, %v330
      %v332 = vand.u32 %v331, 4294901760
      %333 = vmatpush1.msra.mxu0 %v332
      %334 = vmatprep.subr.mxu0 0.0
      %v335 = vand.u32 %v200, 4294901760
      %v336 = vsub.f32 %v200, %v335
      %v337 = vand.u32 %v336, 4294901760
      %v338 = vsub.f32 %v336, %v337
      %v339 = vand.u32 %v338, 4294901760
      %340 = vmatpush1.msra.mxu0 %v339
      %341 = vmatprep.subr.mxu0 0.0
      %v342 = vand.u32 %v201, 4294901760
      %v343 = vsub.f32 %v201, %v342
      %v344 = vand.u32 %v343, 4294901760
      %v345 = vsub.f32 %v343, %v344
      %v346 = vand.u32 %v345, 4294901760
      %347 = vmatpush1.msra.mxu0 %v346
      %348 = vmatprep.subr.mxu0 0.0
      %v349 = vand.u32 %v202, 4294901760
      %v350 = vsub.f32 %v202, %v349
      %v351 = vand.u32 %v350, 4294901760
      %v352 = vsub.f32 %v350, %v351
      %v353 = vand.u32 %v352, 4294901760
      %354 = vmatpush1.msra.mxu0 %v353
      %355 = vmatprep.subr.mxu0 0.0
      %v356 = vand.u32 %v203, 4294901760
      %v357 = vsub.f32 %v203, %v356
      %v358 = vand.u32 %v357, 4294901760
      %v359 = vsub.f32 %v357, %v358
      %v360 = vand.u32 %v359, 4294901760
      %361 = vmatpush1.msra.mxu0 %v360
      %362 = vmatprep.subr.mxu0 0.0
      %v363 = vand.u32 %v204, 4294901760
      %v364 = vsub.f32 %v204, %v363
      %v365 = vand.u32 %v364, 4294901760
      %v366 = vsub.f32 %v364, %v365
      %v367 = vand.u32 %v366, 4294901760
      %368 = vmatpush1.msra.mxu0 %v367
      %369 = vmatprep.subr.mxu0 0.0
      %370 = vmatpush1.msra.mxu0 0.0
      %371 = vmatprep.subr.mxu0 0.0
      %372 = vmatpush1.msra.mxu0 0.0
      %373 = vmatprep.subr.mxu0 0.0
      %374 = vmatpush1.msra.mxu0 0.0
      %375 = vmatprep.subr.mxu0 0.0
      %376 = vmatpush1.msra.mxu0 0.0
      %377 = vmatprep.subr.mxu0 0.0
      %378 = vmatpush1.msra.mxu0 0.0
      %379 = vmatprep.subr.mxu0 0.0
      %380 = vmatpush1.msra.mxu0 0.0
      %381 = vmatprep.subr.mxu0 0.0
      %382 = vmatpush1.msra.mxu0 0.0
      %383 = vmatprep.subr.mxu0 0.0
      %384 = vmatpush1.msra.mxu0 0.0
      %385 = vmatprep.subr.mxu0 0.0
      %386 = vmatpush1.msra.mxu0 0.0
      %387 = vmatprep.subr.mxu0 0.0
      %388 = vmatpush1.msra.mxu0 0.0
      %389 = vmatprep.subr.mxu0 0.0
      %390 = vmatpush1.msra.mxu0 0.0
      %391 = vmatprep.subr.mxu0 0.0
      %392 = vmatpush1.msra.mxu0 0.0
      %393 = vmatprep.subr.mxu0 0.0
      %394 = vmatpush1.msra.mxu0 0.0
      %395 = vmatprep.subr.mxu0 0.0
      %396 = vmatpush1.msra.mxu0 0.0
      %397 = vmatprep.subr.mxu0 0.0
      %398 = vmatpush1.msra.mxu0 0.0
      %399 = vmatprep.subr.mxu0 0.0
      %400 = vmatpush1.msra.mxu0 0.0
      %401 = vmatprep.subr.mxu0 0.0
      %402 = vmatpush1.msra.mxu0 0.0
      %403 = vmatprep.subr.mxu0 0.0
      %404 = vmatpush1.msra.mxu0 0.0
      %405 = vmatprep.subr.mxu0 0.0
      %406 = vmatpush1.msra.mxu0 0.0
      %407 = vmatprep.subr.mxu0 0.0
      %408 = vmatpush1.msra.mxu0 0.0
      %409 = vmatprep.subr.mxu0 0.0
      %410 = vmatpush1.msra.mxu0 0.0
      %411 = vmatprep.subr.mxu0 0.0
      %412 = vmatpush1.msra.mxu0 0.0
      %413 = vmatprep.subr.mxu0 0.0
      %414 = vmatpush1.msra.mxu0 0.0
      %415 = vmatprep.mubr.f32.mxu0 0.0
      %v416 = vand.u32 %v207, 4294901760
      %417 = vmatmul.mubr.f32.gmra.mrb[0].mxu0 %v416
      %v418 = vpop.f32.mrb[0].mxu0
      %v419 = vadd.f32 %v293, %v418
      %v420 = vpop.f32.mrb[0].mxu0
      %421 = vmatprep.mubr.f32.mxu0 0.0
      %v422 = vand.u32 %v210, 4294901760
      %423 = vmatmul.mubr.f32.gmra.mrb[0].mxu0 %v422
      %v424 = vpop.f32.mrb[0].mxu0
      %v425 = vadd.f32 %v303, %v424
      %v426 = vpop.f32.mrb[0].mxu0
      %427 = vdwg.mxu0
      %428 = vmatprep.subr.mxu0 0.0
      %v429 = vand.u32 %v196, 4294901760
      %v430 = vsub.f32 %v196, %v429
      %431 = vmatpush1.msra.mxu0 %v430
      %432 = vmatprep.subr.mxu0 0.0
      %v433 = vand.u32 %v197, 4294901760
      %v434 = vsub.f32 %v197, %v433
      %435 = vmatpush1.msra.mxu0 %v434
      %436 = vmatprep.subr.mxu0 0.0
      %v437 = vand.u32 %v198, 4294901760
      %v438 = vsub.f32 %v198, %v437
      %439 = vmatpush1.msra.mxu0 %v438
      %440 = vmatprep.subr.mxu0 0.0
      %v441 = vand.u32 %v199, 4294901760
      %v442 = vsub.f32 %v199, %v441
      %443 = vmatpush1.msra.mxu0 %v442
      %444 = vmatprep.subr.mxu0 0.0
      %v445 = vand.u32 %v200, 4294901760
      %v446 = vsub.f32 %v200, %v445
      %447 = vmatpush1.msra.mxu0 %v446
      %448 = vmatprep.subr.mxu0 0.0
      %v449 = vand.u32 %v201, 4294901760
      %v450 = vsub.f32 %v201, %v449
      %451 = vmatpush1.msra.mxu0 %v450
      %452 = vmatprep.subr.mxu0 0.0
      %v453 = vand.u32 %v202, 4294901760
      %v454 = vsub.f32 %v202, %v453
      %455 = vmatpush1.msra.mxu0 %v454
      %456 = vmatprep.subr.mxu0 0.0
      %v457 = vand.u32 %v203, 4294901760
      %v458 = vsub.f32 %v203, %v457
      %459 = vmatpush1.msra.mxu0 %v458
      %460 = vmatprep.subr.mxu0 0.0
      %v461 = vand.u32 %v204, 4294901760
      %v462 = vsub.f32 %v204, %v461
      %463 = vmatpush1.msra.mxu0 %v462
      %464 = vmatprep.subr.mxu0 0.0
      %465 = vmatpush1.msra.mxu0 0.0
      %466 = vmatprep.subr.mxu0 0.0
      %467 = vmatpush1.msra.mxu0 0.0
      %468 = vmatprep.subr.mxu0 0.0
      %469 = vmatpush1.msra.mxu0 0.0
      %470 = vmatprep.subr.mxu0 0.0
      %471 = vmatpush1.msra.mxu0 0.0
      %472 = vmatprep.subr.mxu0 0.0
      %473 = vmatpush1.msra.mxu0 0.0
      %474 = vmatprep.subr.mxu0 0.0
      %475 = vmatpush1.msra.mxu0 0.0
      %476 = vmatprep.subr.mxu0 0.0
      %477 = vmatpush1.msra.mxu0 0.0
      %478 = vmatprep.subr.mxu0 0.0
      %479 = vmatpush1.msra.mxu0 0.0
      %480 = vmatprep.subr.mxu0 0.0
      %481 = vmatpush1.msra.mxu0 0.0
      %482 = vmatprep.subr.mxu0 0.0
      %483 = vmatpush1.msra.mxu0 0.0
      %484 = vmatprep.subr.mxu0 0.0
      %485 = vmatpush1.msra.mxu0 0.0
      %486 = vmatprep.subr.mxu0 0.0
      %487 = vmatpush1.msra.mxu0 0.0
      %488 = vmatprep.subr.mxu0 0.0
      %489 = vmatpush1.msra.mxu0 0.0
      %490 = vmatprep.subr.mxu0 0.0
      %491 = vmatpush1.msra.mxu0 0.0
      %492 = vmatprep.subr.mxu0 0.0
      %493 = vmatpush1.msra.mxu0 0.0
      %494 = vmatprep.subr.mxu0 0.0
      %495 = vmatpush1.msra.mxu0 0.0
      %496 = vmatprep.subr.mxu0 0.0
      %497 = vmatpush1.msra.mxu0 0.0
      %498 = vmatprep.subr.mxu0 0.0
      %499 = vmatpush1.msra.mxu0 0.0
      %500 = vmatprep.subr.mxu0 0.0
      %501 = vmatpush1.msra.mxu0 0.0
      %502 = vmatprep.subr.mxu0 0.0
      %503 = vmatpush1.msra.mxu0 0.0
      %504 = vmatprep.subr.mxu0 0.0
      %505 = vmatpush1.msra.mxu0 0.0
      %506 = vmatprep.subr.mxu0 0.0
      %507 = vmatpush1.msra.mxu0 0.0
      %508 = vmatprep.subr.mxu0 0.0
      %509 = vmatpush1.msra.mxu0 0.0
      %510 = vmatprep.mubr.f32.mxu0 0.0
      %v511 = vand.u32 %v207, 4294901760
      %v512 = vsub.f32 %v207, %v511
      %513 = vmatmul.mubr.f32.gmra.mrb[0].mxu0 %v512
      %v514 = vpop.f32.mrb[0].mxu0
      %v515 = vadd.f32 %v419, %v514
      %v516 = vpop.f32.mrb[0].mxu0
      %517 = vmatprep.mubr.f32.mxu0 0.0
      %v518 = vand.u32 %v210, 4294901760
      %v519 = vsub.f32 %v210, %v518
      %520 = vmatmul.mubr.f32.gmra.mrb[0].mxu0 %v519
      %v521 = vpop.f32.mrb[0].mxu0
      %v522 = vadd.f32 %v425, %v521
      %v523 = vpop.f32.mrb[0].mxu0
      %524 = vdwg.mxu0
      %525 = vmatprep.subr.mxu0 0.0
      %v526 = vand.u32 %v196, 4294901760
      %527 = vmatpush1.msra.mxu0 %v526
      %528 = vmatprep.subr.mxu0 0.0
      %v529 = vand.u32 %v197, 4294901760
      %530 = vmatpush1.msra.mxu0 %v529
      %531 = vmatprep.subr.mxu0 0.0
      %v532 = vand.u32 %v198, 4294901760
      %533 = vmatpush1.msra.mxu0 %v532
      %534 = vmatprep.subr.mxu0 0.0
      %v535 = vand.u32 %v199, 4294901760
      %536 = vmatpush1.msra.mxu0 %v535
      %537 = vmatprep.subr.mxu0 0.0
      %v538 = vand.u32 %v200, 4294901760
      %539 = vmatpush1.msra.mxu0 %v538
      %540 = vmatprep.subr.mxu0 0.0
      %v541 = vand.u32 %v201, 4294901760
      %542 = vmatpush1.msra.mxu0 %v541
      %543 = vmatprep.subr.mxu0 0.0
      %v544 = vand.u32 %v202, 4294901760
      %545 = vmatpush1.msra.mxu0 %v544
      %546 = vmatprep.subr.mxu0 0.0
      %v547 = vand.u32 %v203, 4294901760
      %548 = vmatpush1.msra.mxu0 %v547
      %549 = vmatprep.subr.mxu0 0.0
      %v550 = vand.u32 %v204, 4294901760
      %551 = vmatpush1.msra.mxu0 %v550
      %552 = vmatprep.subr.mxu0 0.0
      %553 = vmatpush1.msra.mxu0 0.0
      %554 = vmatprep.subr.mxu0 0.0
      %555 = vmatpush1.msra.mxu0 0.0
      %556 = vmatprep.subr.mxu0 0.0
      %557 = vmatpush1.msra.mxu0 0.0
      %558 = vmatprep.subr.mxu0 0.0
      %559 = vmatpush1.msra.mxu0 0.0
      %560 = vmatprep.subr.mxu0 0.0
      %561 = vmatpush1.msra.mxu0 0.0
      %562 = vmatprep.subr.mxu0 0.0
      %563 = vmatpush1.msra.mxu0 0.0
      %564 = vmatprep.subr.mxu0 0.0
      %565 = vmatpush1.msra.mxu0 0.0
      %566 = vmatprep.subr.mxu0 0.0
      %567 = vmatpush1.msra.mxu0 0.0
      %568 = vmatprep.subr.mxu0 0.0
      %569 = vmatpush1.msra.mxu0 0.0
      %570 = vmatprep.subr.mxu0 0.0
      %571 = vmatpush1.msra.mxu0 0.0
      %572 = vmatprep.subr.mxu0 0.0
      %573 = vmatpush1.msra.mxu0 0.0
      %574 = vmatprep.subr.mxu0 0.0
      %575 = vmatpush1.msra.mxu0 0.0
      %576 = vmatprep.subr.mxu0 0.0
      %577 = vmatpush1.msra.mxu0 0.0
      %578 = vmatprep.subr.mxu0 0.0
      %579 = vmatpush1.msra.mxu0 0.0
      %580 = vmatprep.subr.mxu0 0.0
      %581 = vmatpush1.msra.mxu0 0.0
      %582 = vmatprep.subr.mxu0 0.0
      %583 = vmatpush1.msra.mxu0 0.0
      %584 = vmatprep.subr.mxu0 0.0
      %585 = vmatpush1.msra.mxu0 0.0
      %586 = vmatprep.subr.mxu0 0.0
      %587 = vmatpush1.msra.mxu0 0.0
      %588 = vmatprep.subr.mxu0 0.0
      %589 = vmatpush1.msra.mxu0 0.0
      %590 = vmatprep.subr.mxu0 0.0
      %591 = vmatpush1.msra.mxu0 0.0
      %592 = vmatprep.subr.mxu0 0.0
      %593 = vmatpush1.msra.mxu0 0.0
      %594 = vmatprep.subr.mxu0 0.0
      %595 = vmatpush1.msra.mxu0 0.0
      %596 = vmatprep.subr.mxu0 0.0
      %597 = vmatpush1.msra.mxu0 0.0
      %598 = vmatprep.mubr.f32.mxu0 0.0
      %v599 = vand.u32 %v207, 4294901760
      %v600 = vsub.f32 %v207, %v599
      %v601 = vand.u32 %v600, 4294901760
      %602 = vmatmul.mubr.f32.gmra.mrb[0].mxu0 %v601
      %v603 = vpop.f32.mrb[0].mxu0
      %v604 = vadd.f32 %v515, %v603
      %v605 = vpop.f32.mrb[0].mxu0
      %606 = vmatprep.mubr.f32.mxu0 0.0
      %v607 = vand.u32 %v210, 4294901760
      %v608 = vsub.f32 %v210, %v607
      %v609 = vand.u32 %v608, 4294901760
      %610 = vmatmul.mubr.f32.gmra.mrb[0].mxu0 %v609
      %v611 = vpop.f32.mrb[0].mxu0
      %v612 = vadd.f32 %v522, %v611
      %v613 = vpop.f32.mrb[0].mxu0
      %614 = vdwg.mxu0
      %615 = vmatprep.subr.mxu0 0.0
      %v616 = vand.u32 %v196, 4294901760
      %v617 = vsub.f32 %v196, %v616
      %v618 = vand.u32 %v617, 4294901760
      %619 = vmatpush1.msra.mxu0 %v618
      %620 = vmatprep.subr.mxu0 0.0
      %v621 = vand.u32 %v197, 4294901760
      %v622 = vsub.f32 %v197, %v621
      %v623 = vand.u32 %v622, 4294901760
      %624 = vmatpush1.msra.mxu0 %v623
      %625 = vmatprep.subr.mxu0 0.0
      %v626 = vand.u32 %v198, 4294901760
      %v627 = vsub.f32 %v198, %v626
      %v628 = vand.u32 %v627, 4294901760
      %629 = vmatpush1.msra.mxu0 %v628
      %630 = vmatprep.subr.mxu0 0.0
      %v631 = vand.u32 %v199, 4294901760
      %v632 = vsub.f32 %v199, %v631
      %v633 = vand.u32 %v632, 4294901760
      %634 = vmatpush1.msra.mxu0 %v633
      %635 = vmatprep.subr.mxu0 0.0
      %v636 = vand.u32 %v200, 4294901760
      %v637 = vsub.f32 %v200, %v636
      %v638 = vand.u32 %v637, 4294901760
      %639 = vmatpush1.msra.mxu0 %v638
      %640 = vmatprep.subr.mxu0 0.0
      %v641 = vand.u32 %v201, 4294901760
      %v642 = vsub.f32 %v201, %v641
      %v643 = vand.u32 %v642, 4294901760
      %644 = vmatpush1.msra.mxu0 %v643
      %645 = vmatprep.subr.mxu0 0.0
      %v646 = vand.u32 %v202, 4294901760
      %v647 = vsub.f32 %v202, %v646
      %v648 = vand.u32 %v647, 4294901760
      %649 = vmatpush1.msra.mxu0 %v648
      %650 = vmatprep.subr.mxu0 0.0
      %v651 = vand.u32 %v203, 4294901760
      %v652 = vsub.f32 %v203, %v651
      %v653 = vand.u32 %v652, 4294901760
      %654 = vmatpush1.msra.mxu0 %v653
      %655 = vmatprep.subr.mxu0 0.0
      %v656 = vand.u32 %v204, 4294901760
      %v657 = vsub.f32 %v204, %v656
      %v658 = vand.u32 %v657, 4294901760
      %659 = vmatpush1.msra.mxu0 %v658
      %660 = vmatprep.subr.mxu0 0.0
      %661 = vmatpush1.msra.mxu0 0.0
      %662 = vmatprep.subr.mxu0 0.0
      %663 = vmatpush1.msra.mxu0 0.0
      %664 = vmatprep.subr.mxu0 0.0
      %665 = vmatpush1.msra.mxu0 0.0
      %666 = vmatprep.subr.mxu0 0.0
      %667 = vmatpush1.msra.mxu0 0.0
      %668 = vmatprep.subr.mxu0 0.0
      %669 = vmatpush1.msra.mxu0 0.0
      %670 = vmatprep.subr.mxu0 0.0
      %671 = vmatpush1.msra.mxu0 0.0
      %672 = vmatprep.subr.mxu0 0.0
      %673 = vmatpush1.msra.mxu0 0.0
      %674 = vmatprep.subr.mxu0 0.0
      %675 = vmatpush1.msra.mxu0 0.0
      %676 = vmatprep.subr.mxu0 0.0
      %677 = vmatpush1.msra.mxu0 0.0
      %678 = vmatprep.subr.mxu0 0.0
      %679 = vmatpush1.msra.mxu0 0.0
      %680 = vmatprep.subr.mxu0 0.0
      %681 = vmatpush1.msra.mxu0 0.0
      %682 = vmatprep.subr.mxu0 0.0
      %683 = vmatpush1.msra.mxu0 0.0
      %684 = vmatprep.subr.mxu0 0.0
      %685 = vmatpush1.msra.mxu0 0.0
      %686 = vmatprep.subr.mxu0 0.0
      %687 = vmatpush1.msra.mxu0 0.0
      %688 = vmatprep.subr.mxu0 0.0
      %689 = vmatpush1.msra.mxu0 0.0
      %690 = vmatprep.subr.mxu0 0.0
      %691 = vmatpush1.msra.mxu0 0.0
      %692 = vmatprep.subr.mxu0 0.0
      %693 = vmatpush1.msra.mxu0 0.0
      %694 = vmatprep.subr.mxu0 0.0
      %695 = vmatpush1.msra.mxu0 0.0
      %696 = vmatprep.subr.mxu0 0.0
      %697 = vmatpush1.msra.mxu0 0.0
      %698 = vmatprep.subr.mxu0 0.0
      %699 = vmatpush1.msra.mxu0 0.0
      %700 = vmatprep.subr.mxu0 0.0
      %701 = vmatpush1.msra.mxu0 0.0
      %702 = vmatprep.subr.mxu0 0.0
      %703 = vmatpush1.msra.mxu0 0.0
      %704 = vmatprep.subr.mxu0 0.0
      %705 = vmatpush1.msra.mxu0 0.0
      %706 = vmatprep.mubr.f32.mxu0 0.0
      %v707 = vand.u32 %v207, 4294901760
      %708 = vmatmul.mubr.f32.gmra.mrb[0].mxu0 %v707
      %v709 = vpop.f32.mrb[0].mxu0
      %v710 = vadd.f32 %v604, %v709
      %v711 = vpop.f32.mrb[0].mxu0
      %712 = vmatprep.mubr.f32.mxu0 0.0
      %v713 = vand.u32 %v210, 4294901760
      %714 = vmatmul.mubr.f32.gmra.mrb[0].mxu0 %v713
      %v715 = vpop.f32.mrb[0].mxu0
      %v716 = vadd.f32 %v612, %v715
      %v717 = vpop.f32.mrb[0].mxu0
      %718 = vdwg.mxu0
      %719 = vmatprep.subr.mxu0 0.0
      %v720 = vand.u32 %v196, 4294901760
      %721 = vmatpush1.msra.mxu0 %v720
      %722 = vmatprep.subr.mxu0 0.0
      %v723 = vand.u32 %v197, 4294901760
      %724 = vmatpush1.msra.mxu0 %v723
      %725 = vmatprep.subr.mxu0 0.0
      %v726 = vand.u32 %v198, 4294901760
      %727 = vmatpush1.msra.mxu0 %v726
      %728 = vmatprep.subr.mxu0 0.0
      %v729 = vand.u32 %v199, 4294901760
      %730 = vmatpush1.msra.mxu0 %v729
      %731 = vmatprep.subr.mxu0 0.0
      %v732 = vand.u32 %v200, 4294901760
      %733 = vmatpush1.msra.mxu0 %v732
      %734 = vmatprep.subr.mxu0 0.0
      %v735 = vand.u32 %v201, 4294901760
      %736 = vmatpush1.msra.mxu0 %v735
      %737 = vmatprep.subr.mxu0 0.0
      %v738 = vand.u32 %v202, 4294901760
      %739 = vmatpush1.msra.mxu0 %v738
      %740 = vmatprep.subr.mxu0 0.0
      %v741 = vand.u32 %v203, 4294901760
      %742 = vmatpush1.msra.mxu0 %v741
      %743 = vmatprep.subr.mxu0 0.0
      %v744 = vand.u32 %v204, 4294901760
      %745 = vmatpush1.msra.mxu0 %v744
      %746 = vmatprep.subr.mxu0 0.0
      %747 = vmatpush1.msra.mxu0 0.0
      %748 = vmatprep.subr.mxu0 0.0
      %749 = vmatpush1.msra.mxu0 0.0
      %750 = vmatprep.subr.mxu0 0.0
      %751 = vmatpush1.msra.mxu0 0.0
      %752 = vmatprep.subr.mxu0 0.0
      %753 = vmatpush1.msra.mxu0 0.0
      %754 = vmatprep.subr.mxu0 0.0
      %755 = vmatpush1.msra.mxu0 0.0
      %756 = vmatprep.subr.mxu0 0.0
      %757 = vmatpush1.msra.mxu0 0.0
      %758 = vmatprep.subr.mxu0 0.0
      %759 = vmatpush1.msra.mxu0 0.0
      %760 = vmatprep.subr.mxu0 0.0
      %761 = vmatpush1.msra.mxu0 0.0
      %762 = vmatprep.subr.mxu0 0.0
      %763 = vmatpush1.msra.mxu0 0.0
      %764 = vmatprep.subr.mxu0 0.0
      %765 = vmatpush1.msra.mxu0 0.0
      %766 = vmatprep.subr.mxu0 0.0
      %767 = vmatpush1.msra.mxu0 0.0
      %768 = vmatprep.subr.mxu0 0.0
      %769 = vmatpush1.msra.mxu0 0.0
      %770 = vmatprep.subr.mxu0 0.0
      %771 = vmatpush1.msra.mxu0 0.0
      %772 = vmatprep.subr.mxu0 0.0
      %773 = vmatpush1.msra.mxu0 0.0
      %774 = vmatprep.subr.mxu0 0.0
      %775 = vmatpush1.msra.mxu0 0.0
      %776 = vmatprep.subr.mxu0 0.0
      %777 = vmatpush1.msra.mxu0 0.0
      %778 = vmatprep.subr.mxu0 0.0
      %779 = vmatpush1.msra.mxu0 0.0
      %780 = vmatprep.subr.mxu0 0.0
      %781 = vmatpush1.msra.mxu0 0.0
      %782 = vmatprep.subr.mxu0 0.0
      %783 = vmatpush1.msra.mxu0 0.0
      %784 = vmatprep.subr.mxu0 0.0
      %785 = vmatpush1.msra.mxu0 0.0
      %786 = vmatprep.subr.mxu0 0.0
      %787 = vmatpush1.msra.mxu0 0.0
      %788 = vmatprep.subr.mxu0 0.0
      %789 = vmatpush1.msra.mxu0 0.0
      %790 = vmatprep.subr.mxu0 0.0
      %791 = vmatpush1.msra.mxu0 0.0
      %792 = vmatprep.mubr.f32.mxu0 0.0
      %v793 = vand.u32 %v207, 4294901760
      %794 = vmatmul.mubr.f32.gmra.mrb[0].mxu0 %v793
      %v795 = vpop.f32.mrb[0].mxu0
      %v796 = vadd.f32 %v710, %v795
      %v797 = vpop.f32.mrb[0].mxu0
      %798 = vmatprep.mubr.f32.mxu0 0.0
      %v799 = vand.u32 %v210, 4294901760
      %800 = vmatmul.mubr.f32.gmra.mrb[0].mxu0 %v799
      %v801 = vpop.f32.mrb[0].mxu0
      %v802 = vadd.f32 %v716, %v801
      %v803 = vpop.f32.mrb[0].mxu0
      %804 = vdwg.mxu0
      %v806 = vsel %vm205, %v182, 0
      %v809 = vsel %vm205, %v183, 0
      %811 = vmatprep.subr.mxu0 0.0
      %v812 = vand.u32 %v184, 4294901760
      %813 = vmatpush1.msra.mxu0 %v812
      %814 = vmatprep.subr.mxu0 0.0
      %v815 = vand.u32 %v185, 4294901760
      %816 = vmatpush1.msra.mxu0 %v815
      %817 = vmatprep.subr.mxu0 0.0
      %v818 = vand.u32 %v186, 4294901760
      %819 = vmatpush1.msra.mxu0 %v818
      %820 = vmatprep.subr.mxu0 0.0
      %v821 = vand.u32 %v187, 4294901760
      %822 = vmatpush1.msra.mxu0 %v821
      %823 = vmatprep.subr.mxu0 0.0
      %v824 = vand.u32 %v188, 4294901760
      %825 = vmatpush1.msra.mxu0 %v824
      %826 = vmatprep.subr.mxu0 0.0
      %v827 = vand.u32 %v189, 4294901760
      %828 = vmatpush1.msra.mxu0 %v827
      %829 = vmatprep.subr.mxu0 0.0
      %v830 = vand.u32 %v190, 4294901760
      %831 = vmatpush1.msra.mxu0 %v830
      %832 = vmatprep.subr.mxu0 0.0
      %v833 = vand.u32 %v191, 4294901760
      %834 = vmatpush1.msra.mxu0 %v833
      %835 = vmatprep.subr.mxu0 0.0
      %v836 = vand.u32 %v192, 4294901760
      %837 = vmatpush1.msra.mxu0 %v836
      %838 = vmatprep.subr.mxu0 0.0
      %839 = vmatpush1.msra.mxu0 0.0
      %840 = vmatprep.subr.mxu0 0.0
      %841 = vmatpush1.msra.mxu0 0.0
      %842 = vmatprep.subr.mxu0 0.0
      %843 = vmatpush1.msra.mxu0 0.0
      %844 = vmatprep.subr.mxu0 0.0
      %845 = vmatpush1.msra.mxu0 0.0
      %846 = vmatprep.subr.mxu0 0.0
      %847 = vmatpush1.msra.mxu0 0.0
      %848 = vmatprep.subr.mxu0 0.0
      %849 = vmatpush1.msra.mxu0 0.0
      %850 = vmatprep.subr.mxu0 0.0
      %851 = vmatpush1.msra.mxu0 0.0
      %852 = vmatprep.subr.mxu0 0.0
      %853 = vmatpush1.msra.mxu0 0.0
      %854 = vmatprep.subr.mxu0 0.0
      %855 = vmatpush1.msra.mxu0 0.0
      %856 = vmatprep.subr.mxu0 0.0
      %857 = vmatpush1.msra.mxu0 0.0
      %858 = vmatprep.subr.mxu0 0.0
      %859 = vmatpush1.msra.mxu0 0.0
      %860 = vmatprep.subr.mxu0 0.0
      %861 = vmatpush1.msra.mxu0 0.0
      %862 = vmatprep.subr.mxu0 0.0
      %863 = vmatpush1.msra.mxu0 0.0
      %864 = vmatprep.subr.mxu0 0.0
      %865 = vmatpush1.msra.mxu0 0.0
      %866 = vmatprep.subr.mxu0 0.0
      %867 = vmatpush1.msra.mxu0 0.0
      %868 = vmatprep.subr.mxu0 0.0
      %869 = vmatpush1.msra.mxu0 0.0
      %870 = vmatprep.subr.mxu0 0.0
      %871 = vmatpush1.msra.mxu0 0.0
      %872 = vmatprep.subr.mxu0 0.0
      %873 = vmatpush1.msra.mxu0 0.0
      %874 = vmatprep.subr.mxu0 0.0
      %875 = vmatpush1.msra.mxu0 0.0
      %876 = vmatprep.subr.mxu0 0.0
      %877 = vmatpush1.msra.mxu0 0.0
      %878 = vmatprep.subr.mxu0 0.0
      %879 = vmatpush1.msra.mxu0 0.0
      %880 = vmatprep.subr.mxu0 0.0
      %881 = vmatpush1.msra.mxu0 0.0
      %882 = vmatprep.subr.mxu0 0.0
      %883 = vmatpush1.msra.mxu0 0.0
      %884 = vmatprep.mubr.f32.mxu0 0.0
      %v885 = vand.u32 %v806, 4294901760
      %v886 = vsub.f32 %v806, %v885
      %v887 = vand.u32 %v886, 4294901760
      %v888 = vsub.f32 %v886, %v887
      %v889 = vand.u32 %v888, 4294901760
      %890 = vmatmul.mubr.f32.gmra.mrb[0].mxu0 %v889
      %v891 = vpop.f32.mrb[0].mxu0
      %v892 = vadd.f32 %v796, %v891
      %v893 = vpop.f32.mrb[0].mxu0
      %894 = vmatprep.mubr.f32.mxu0 0.0
      %v895 = vand.u32 %v809, 4294901760
      %v896 = vsub.f32 %v809, %v895
      %v897 = vand.u32 %v896, 4294901760
      %v898 = vsub.f32 %v896, %v897
      %v899 = vand.u32 %v898, 4294901760
      %900 = vmatmul.mubr.f32.gmra.mrb[0].mxu0 %v899
      %v901 = vpop.f32.mrb[0].mxu0
      %v902 = vadd.f32 %v802, %v901
      %v903 = vpop.f32.mrb[0].mxu0
      %904 = vdwg.mxu0
      %905 = vmatprep.subr.mxu0 0.0
      %v906 = vand.u32 %v184, 4294901760
      %v907 = vsub.f32 %v184, %v906
      %v908 = vand.u32 %v907, 4294901760
      %v909 = vsub.f32 %v907, %v908
      %v910 = vand.u32 %v909, 4294901760
      %911 = vmatpush1.msra.mxu0 %v910
      %912 = vmatprep.subr.mxu0 0.0
      %v913 = vand.u32 %v185, 4294901760
      %v914 = vsub.f32 %v185, %v913
      %v915 = vand.u32 %v914, 4294901760
      %v916 = vsub.f32 %v914, %v915
      %v917 = vand.u32 %v916, 4294901760
      %918 = vmatpush1.msra.mxu0 %v917
      %919 = vmatprep.subr.mxu0 0.0
      %v920 = vand.u32 %v186, 4294901760
      %v921 = vsub.f32 %v186, %v920
      %v922 = vand.u32 %v921, 4294901760
      %v923 = vsub.f32 %v921, %v922
      %v924 = vand.u32 %v923, 4294901760
      %925 = vmatpush1.msra.mxu0 %v924
      %926 = vmatprep.subr.mxu0 0.0
      %v927 = vand.u32 %v187, 4294901760
      %v928 = vsub.f32 %v187, %v927
      %v929 = vand.u32 %v928, 4294901760
      %v930 = vsub.f32 %v928, %v929
      %v931 = vand.u32 %v930, 4294901760
      %932 = vmatpush1.msra.mxu0 %v931
      %933 = vmatprep.subr.mxu0 0.0
      %v934 = vand.u32 %v188, 4294901760
      %v935 = vsub.f32 %v188, %v934
      %v936 = vand.u32 %v935, 4294901760
      %v937 = vsub.f32 %v935, %v936
      %v938 = vand.u32 %v937, 4294901760
      %939 = vmatpush1.msra.mxu0 %v938
      %940 = vmatprep.subr.mxu0 0.0
      %v941 = vand.u32 %v189, 4294901760
      %v942 = vsub.f32 %v189, %v941
      %v943 = vand.u32 %v942, 4294901760
      %v944 = vsub.f32 %v942, %v943
      %v945 = vand.u32 %v944, 4294901760
      %946 = vmatpush1.msra.mxu0 %v945
      %947 = vmatprep.subr.mxu0 0.0
      %v948 = vand.u32 %v190, 4294901760
      %v949 = vsub.f32 %v190, %v948
      %v950 = vand.u32 %v949, 4294901760
      %v951 = vsub.f32 %v949, %v950
      %v952 = vand.u32 %v951, 4294901760
      %953 = vmatpush1.msra.mxu0 %v952
      %954 = vmatprep.subr.mxu0 0.0
      %v955 = vand.u32 %v191, 4294901760
      %v956 = vsub.f32 %v191, %v955
      %v957 = vand.u32 %v956, 4294901760
      %v958 = vsub.f32 %v956, %v957
      %v959 = vand.u32 %v958, 4294901760
      %960 = vmatpush1.msra.mxu0 %v959
      %961 = vmatprep.subr.mxu0 0.0
      %v962 = vand.u32 %v192, 4294901760
      %v963 = vsub.f32 %v192, %v962
      %v964 = vand.u32 %v963, 4294901760
      %v965 = vsub.f32 %v963, %v964
      %v966 = vand.u32 %v965, 4294901760
      %967 = vmatpush1.msra.mxu0 %v966
      %968 = vmatprep.subr.mxu0 0.0
      %969 = vmatpush1.msra.mxu0 0.0
      %970 = vmatprep.subr.mxu0 0.0
      %971 = vmatpush1.msra.mxu0 0.0
      %972 = vmatprep.subr.mxu0 0.0
      %973 = vmatpush1.msra.mxu0 0.0
      %974 = vmatprep.subr.mxu0 0.0
      %975 = vmatpush1.msra.mxu0 0.0
      %976 = vmatprep.subr.mxu0 0.0
      %977 = vmatpush1.msra.mxu0 0.0
      %978 = vmatprep.subr.mxu0 0.0
      %979 = vmatpush1.msra.mxu0 0.0
      %980 = vmatprep.subr.mxu0 0.0
      %981 = vmatpush1.msra.mxu0 0.0
      %982 = vmatprep.subr.mxu0 0.0
      %983 = vmatpush1.msra.mxu0 0.0
      %984 = vmatprep.subr.mxu0 0.0
      %985 = vmatpush1.msra.mxu0 0.0
      %986 = vmatprep.subr.mxu0 0.0
      %987 = vmatpush1.msra.mxu0 0.0
      %988 = vmatprep.subr.mxu0 0.0
      %989 = vmatpush1.msra.mxu0 0.0
      %990 = vmatprep.subr.mxu0 0.0
      %991 = vmatpush1.msra.mxu0 0.0
      %992 = vmatprep.subr.mxu0 0.0
      %993 = vmatpush1.msra.mxu0 0.0
      %994 = vmatprep.subr.mxu0 0.0
      %995 = vmatpush1.msra.mxu0 0.0
      %996 = vmatprep.subr.mxu0 0.0
      %997 = vmatpush1.msra.mxu0 0.0
      %998 = vmatprep.subr.mxu0 0.0
      %999 = vmatpush1.msra.mxu0 0.0
      %1000 = vmatprep.subr.mxu0 0.0
      %1001 = vmatpush1.msra.mxu0 0.0
      %1002 = vmatprep.subr.mxu0 0.0
      %1003 = vmatpush1.msra.mxu0 0.0
      %1004 = vmatprep.subr.mxu0 0.0
      %1005 = vmatpush1.msra.mxu0 0.0
      %1006 = vmatprep.subr.mxu0 0.0
      %1007 = vmatpush1.msra.mxu0 0.0
      %1008 = vmatprep.subr.mxu0 0.0
      %1009 = vmatpush1.msra.mxu0 0.0
      %1010 = vmatprep.subr.mxu0 0.0
      %1011 = vmatpush1.msra.mxu0 0.0
      %1012 = vmatprep.subr.mxu0 0.0
      %1013 = vmatpush1.msra.mxu0 0.0
      %1014 = vmatprep.mubr.f32.mxu0 0.0
      %v1015 = vand.u32 %v806, 4294901760
      %1016 = vmatmul.mubr.f32.gmra.mrb[0].mxu0 %v1015
      %v1017 = vpop.f32.mrb[0].mxu0
      %v1018 = vadd.f32 %v892, %v1017
      %v1019 = vpop.f32.mrb[0].mxu0
      %1020 = vmatprep.mubr.f32.mxu0 0.0
      %v1021 = vand.u32 %v809, 4294901760
      %1022 = vmatmul.mubr.f32.gmra.mrb[0].mxu0 %v1021
      %v1023 = vpop.f32.mrb[0].mxu0
      %v1024 = vadd.f32 %v902, %v1023
      %v1025 = vpop.f32.mrb[0].mxu0
      %1026 = vdwg.mxu0
      %1027 = vmatprep.subr.mxu0 0.0
      %v1028 = vand.u32 %v184, 4294901760
      %v1029 = vsub.f32 %v184, %v1028
      %1030 = vmatpush1.msra.mxu0 %v1029
      %1031 = vmatprep.subr.mxu0 0.0
      %v1032 = vand.u32 %v185, 4294901760
      %v1033 = vsub.f32 %v185, %v1032
      %1034 = vmatpush1.msra.mxu0 %v1033
      %1035 = vmatprep.subr.mxu0 0.0
      %v1036 = vand.u32 %v186, 4294901760
      %v1037 = vsub.f32 %v186, %v1036
      %1038 = vmatpush1.msra.mxu0 %v1037
      %1039 = vmatprep.subr.mxu0 0.0
      %v1040 = vand.u32 %v187, 4294901760
      %v1041 = vsub.f32 %v187, %v1040
      %1042 = vmatpush1.msra.mxu0 %v1041
      %1043 = vmatprep.subr.mxu0 0.0
      %v1044 = vand.u32 %v188, 4294901760
      %v1045 = vsub.f32 %v188, %v1044
      %1046 = vmatpush1.msra.mxu0 %v1045
      %1047 = vmatprep.subr.mxu0 0.0
      %v1048 = vand.u32 %v189, 4294901760
      %v1049 = vsub.f32 %v189, %v1048
      %1050 = vmatpush1.msra.mxu0 %v1049
      %1051 = vmatprep.subr.mxu0 0.0
      %v1052 = vand.u32 %v190, 4294901760
      %v1053 = vsub.f32 %v190, %v1052
      %1054 = vmatpush1.msra.mxu0 %v1053
      %1055 = vmatprep.subr.mxu0 0.0
      %v1056 = vand.u32 %v191, 4294901760
      %v1057 = vsub.f32 %v191, %v1056
      %1058 = vmatpush1.msra.mxu0 %v1057
      %1059 = vmatprep.subr.mxu0 0.0
      %v1060 = vand.u32 %v192, 4294901760
      %v1061 = vsub.f32 %v192, %v1060
      %1062 = vmatpush1.msra.mxu0 %v1061
      %1063 = vmatprep.subr.mxu0 0.0
      %1064 = vmatpush1.msra.mxu0 0.0
      %1065 = vmatprep.subr.mxu0 0.0
      %1066 = vmatpush1.msra.mxu0 0.0
      %1067 = vmatprep.subr.mxu0 0.0
      %1068 = vmatpush1.msra.mxu0 0.0
      %1069 = vmatprep.subr.mxu0 0.0
      %1070 = vmatpush1.msra.mxu0 0.0
      %1071 = vmatprep.subr.mxu0 0.0
      %1072 = vmatpush1.msra.mxu0 0.0
      %1073 = vmatprep.subr.mxu0 0.0
      %1074 = vmatpush1.msra.mxu0 0.0
      %1075 = vmatprep.subr.mxu0 0.0
      %1076 = vmatpush1.msra.mxu0 0.0
      %1077 = vmatprep.subr.mxu0 0.0
      %1078 = vmatpush1.msra.mxu0 0.0
      %1079 = vmatprep.subr.mxu0 0.0
      %1080 = vmatpush1.msra.mxu0 0.0
      %1081 = vmatprep.subr.mxu0 0.0
      %1082 = vmatpush1.msra.mxu0 0.0
      %1083 = vmatprep.subr.mxu0 0.0
      %1084 = vmatpush1.msra.mxu0 0.0
      %1085 = vmatprep.subr.mxu0 0.0
      %1086 = vmatpush1.msra.mxu0 0.0
      %1087 = vmatprep.subr.mxu0 0.0
      %1088 = vmatpush1.msra.mxu0 0.0
      %1089 = vmatprep.subr.mxu0 0.0
      %1090 = vmatpush1.msra.mxu0 0.0
      %1091 = vmatprep.subr.mxu0 0.0
      %1092 = vmatpush1.msra.mxu0 0.0
      %1093 = vmatprep.subr.mxu0 0.0
      %1094 = vmatpush1.msra.mxu0 0.0
      %1095 = vmatprep.subr.mxu0 0.0
      %1096 = vmatpush1.msra.mxu0 0.0
      %1097 = vmatprep.subr.mxu0 0.0
      %1098 = vmatpush1.msra.mxu0 0.0
      %1099 = vmatprep.subr.mxu0 0.0
      %1100 = vmatpush1.msra.mxu0 0.0
      %1101 = vmatprep.subr.mxu0 0.0
      %1102 = vmatpush1.msra.mxu0 0.0
      %1103 = vmatprep.subr.mxu0 0.0
      %1104 = vmatpush1.msra.mxu0 0.0
      %1105 = vmatprep.subr.mxu0 0.0
      %1106 = vmatpush1.msra.mxu0 0.0
      %1107 = vmatprep.subr.mxu0 0.0
      %1108 = vmatpush1.msra.mxu0 0.0
      %1109 = vmatprep.mubr.f32.mxu0 0.0
      %v1110 = vand.u32 %v806, 4294901760
      %v1111 = vsub.f32 %v806, %v1110
      %1112 = vmatmul.mubr.f32.gmra.mrb[0].mxu0 %v1111
      %v1113 = vpop.f32.mrb[0].mxu0
      %v1114 = vadd.f32 %v1018, %v1113
      %v1115 = vpop.f32.mrb[0].mxu0
      %1116 = vmatprep.mubr.f32.mxu0 0.0
      %v1117 = vand.u32 %v809, 4294901760
      %v1118 = vsub.f32 %v809, %v1117
      %1119 = vmatmul.mubr.f32.gmra.mrb[0].mxu0 %v1118
      %v1120 = vpop.f32.mrb[0].mxu0
      %v1121 = vadd.f32 %v1024, %v1120
      %v1122 = vpop.f32.mrb[0].mxu0
      %1123 = vdwg.mxu0
      %1124 = vmatprep.subr.mxu0 0.0
      %v1125 = vand.u32 %v184, 4294901760
      %1126 = vmatpush1.msra.mxu0 %v1125
      %1127 = vmatprep.subr.mxu0 0.0
      %v1128 = vand.u32 %v185, 4294901760
      %1129 = vmatpush1.msra.mxu0 %v1128
      %1130 = vmatprep.subr.mxu0 0.0
      %v1131 = vand.u32 %v186, 4294901760
      %1132 = vmatpush1.msra.mxu0 %v1131
      %1133 = vmatprep.subr.mxu0 0.0
      %v1134 = vand.u32 %v187, 4294901760
      %1135 = vmatpush1.msra.mxu0 %v1134
      %1136 = vmatprep.subr.mxu0 0.0
      %v1137 = vand.u32 %v188, 4294901760
      %1138 = vmatpush1.msra.mxu0 %v1137
      %1139 = vmatprep.subr.mxu0 0.0
      %v1140 = vand.u32 %v189, 4294901760
      %1141 = vmatpush1.msra.mxu0 %v1140
      %1142 = vmatprep.subr.mxu0 0.0
      %v1143 = vand.u32 %v190, 4294901760
      %1144 = vmatpush1.msra.mxu0 %v1143
      %1145 = vmatprep.subr.mxu0 0.0
      %v1146 = vand.u32 %v191, 4294901760
      %1147 = vmatpush1.msra.mxu0 %v1146
      %1148 = vmatprep.subr.mxu0 0.0
      %v1149 = vand.u32 %v192, 4294901760
      %1150 = vmatpush1.msra.mxu0 %v1149
      %1151 = vmatprep.subr.mxu0 0.0
      %1152 = vmatpush1.msra.mxu0 0.0
      %1153 = vmatprep.subr.mxu0 0.0
      %1154 = vmatpush1.msra.mxu0 0.0
      %1155 = vmatprep.subr.mxu0 0.0
      %1156 = vmatpush1.msra.mxu0 0.0
      %1157 = vmatprep.subr.mxu0 0.0
      %1158 = vmatpush1.msra.mxu0 0.0
      %1159 = vmatprep.subr.mxu0 0.0
      %1160 = vmatpush1.msra.mxu0 0.0
      %1161 = vmatprep.subr.mxu0 0.0
      %1162 = vmatpush1.msra.mxu0 0.0
      %1163 = vmatprep.subr.mxu0 0.0
      %1164 = vmatpush1.msra.mxu0 0.0
      %1165 = vmatprep.subr.mxu0 0.0
      %1166 = vmatpush1.msra.mxu0 0.0
      %1167 = vmatprep.subr.mxu0 0.0
      %1168 = vmatpush1.msra.mxu0 0.0
      %1169 = vmatprep.subr.mxu0 0.0
      %1170 = vmatpush1.msra.mxu0 0.0
      %1171 = vmatprep.subr.mxu0 0.0
      %1172 = vmatpush1.msra.mxu0 0.0
      %1173 = vmatprep.subr.mxu0 0.0
      %1174 = vmatpush1.msra.mxu0 0.0
      %1175 = vmatprep.subr.mxu0 0.0
      %1176 = vmatpush1.msra.mxu0 0.0
      %1177 = vmatprep.subr.mxu0 0.0
      %1178 = vmatpush1.msra.mxu0 0.0
      %1179 = vmatprep.subr.mxu0 0.0
      %1180 = vmatpush1.msra.mxu0 0.0
      %1181 = vmatprep.subr.mxu0 0.0
      %1182 = vmatpush1.msra.mxu0 0.0
      %1183 = vmatprep.subr.mxu0 0.0
      %1184 = vmatpush1.msra.mxu0 0.0
      %1185 = vmatprep.subr.mxu0 0.0
      %1186 = vmatpush1.msra.mxu0 0.0
      %1187 = vmatprep.subr.mxu0 0.0
      %1188 = vmatpush1.msra.mxu0 0.0
      %1189 = vmatprep.subr.mxu0 0.0
      %1190 = vmatpush1.msra.mxu0 0.0
      %1191 = vmatprep.subr.mxu0 0.0
      %1192 = vmatpush1.msra.mxu0 0.0
      %1193 = vmatprep.subr.mxu0 0.0
      %1194 = vmatpush1.msra.mxu0 0.0
      %1195 = vmatprep.subr.mxu0 0.0
      %1196 = vmatpush1.msra.mxu0 0.0
      %1197 = vmatprep.mubr.f32.mxu0 0.0
      %v1198 = vand.u32 %v806, 4294901760
      %v1199 = vsub.f32 %v806, %v1198
      %v1200 = vand.u32 %v1199, 4294901760
      %1201 = vmatmul.mubr.f32.gmra.mrb[0].mxu0 %v1200
      %v1202 = vpop.f32.mrb[0].mxu0
      %v1203 = vadd.f32 %v1114, %v1202
      %v1204 = vpop.f32.mrb[0].mxu0
      %1205 = vmatprep.mubr.f32.mxu0 0.0
      %v1206 = vand.u32 %v809, 4294901760
      %v1207 = vsub.f32 %v809, %v1206
      %v1208 = vand.u32 %v1207, 4294901760
      %1209 = vmatmul.mubr.f32.gmra.mrb[0].mxu0 %v1208
      %v1210 = vpop.f32.mrb[0].mxu0
      %v1211 = vadd.f32 %v1121, %v1210
      %v1212 = vpop.f32.mrb[0].mxu0
      %1213 = vdwg.mxu0
      %1214 = vmatprep.subr.mxu0 0.0
      %v1215 = vand.u32 %v184, 4294901760
      %v1216 = vsub.f32 %v184, %v1215
      %v1217 = vand.u32 %v1216, 4294901760
      %1218 = vmatpush1.msra.mxu0 %v1217
      %1219 = vmatprep.subr.mxu0 0.0
      %v1220 = vand.u32 %v185, 4294901760
      %v1221 = vsub.f32 %v185, %v1220
      %v1222 = vand.u32 %v1221, 4294901760
      %1223 = vmatpush1.msra.mxu0 %v1222
      %1224 = vmatprep.subr.mxu0 0.0
      %v1225 = vand.u32 %v186, 4294901760
      %v1226 = vsub.f32 %v186, %v1225
      %v1227 = vand.u32 %v1226, 4294901760
      %1228 = vmatpush1.msra.mxu0 %v1227
      %1229 = vmatprep.subr.mxu0 0.0
      %v1230 = vand.u32 %v187, 4294901760
      %v1231 = vsub.f32 %v187, %v1230
      %v1232 = vand.u32 %v1231, 4294901760
      %1233 = vmatpush1.msra.mxu0 %v1232
      %1234 = vmatprep.subr.mxu0 0.0
      %v1235 = vand.u32 %v188, 4294901760
      %v1236 = vsub.f32 %v188, %v1235
      %v1237 = vand.u32 %v1236, 4294901760
      %1238 = vmatpush1.msra.mxu0 %v1237
      %1239 = vmatprep.subr.mxu0 0.0
      %v1240 = vand.u32 %v189, 4294901760
      %v1241 = vsub.f32 %v189, %v1240
      %v1242 = vand.u32 %v1241, 4294901760
      %1243 = vmatpush1.msra.mxu0 %v1242
      %1244 = vmatprep.subr.mxu0 0.0
      %v1245 = vand.u32 %v190, 4294901760
      %v1246 = vsub.f32 %v190, %v1245
      %v1247 = vand.u32 %v1246, 4294901760
      %1248 = vmatpush1.msra.mxu0 %v1247
      %1249 = vmatprep.subr.mxu0 0.0
      %v1250 = vand.u32 %v191, 4294901760
      %v1251 = vsub.f32 %v191, %v1250
      %v1252 = vand.u32 %v1251, 4294901760
      %1253 = vmatpush1.msra.mxu0 %v1252
      %1254 = vmatprep.subr.mxu0 0.0
      %v1255 = vand.u32 %v192, 4294901760
      %v1256 = vsub.f32 %v192, %v1255
      %v1257 = vand.u32 %v1256, 4294901760
      %1258 = vmatpush1.msra.mxu0 %v1257
      %1259 = vmatprep.subr.mxu0 0.0
      %1260 = vmatpush1.msra.mxu0 0.0
      %1261 = vmatprep.subr.mxu0 0.0
      %1262 = vmatpush1.msra.mxu0 0.0
      %1263 = vmatprep.subr.mxu0 0.0
      %1264 = vmatpush1.msra.mxu0 0.0
      %1265 = vmatprep.subr.mxu0 0.0
      %1266 = vmatpush1.msra.mxu0 0.0
      %1267 = vmatprep.subr.mxu0 0.0
      %1268 = vmatpush1.msra.mxu0 0.0
      %1269 = vmatprep.subr.mxu0 0.0
      %1270 = vmatpush1.msra.mxu0 0.0
      %1271 = vmatprep.subr.mxu0 0.0
      %1272 = vmatpush1.msra.mxu0 0.0
      %1273 = vmatprep.subr.mxu0 0.0
      %1274 = vmatpush1.msra.mxu0 0.0
      %1275 = vmatprep.subr.mxu0 0.0
      %1276 = vmatpush1.msra.mxu0 0.0
      %1277 = vmatprep.subr.mxu0 0.0
      %1278 = vmatpush1.msra.mxu0 0.0
      %1279 = vmatprep.subr.mxu0 0.0
      %1280 = vmatpush1.msra.mxu0 0.0
      %1281 = vmatprep.subr.mxu0 0.0
      %1282 = vmatpush1.msra.mxu0 0.0
      %1283 = vmatprep.subr.mxu0 0.0
      %1284 = vmatpush1.msra.mxu0 0.0
      %1285 = vmatprep.subr.mxu0 0.0
      %1286 = vmatpush1.msra.mxu0 0.0
      %1287 = vmatprep.subr.mxu0 0.0
      %1288 = vmatpush1.msra.mxu0 0.0
      %1289 = vmatprep.subr.mxu0 0.0
      %1290 = vmatpush1.msra.mxu0 0.0
      %1291 = vmatprep.subr.mxu0 0.0
      %1292 = vmatpush1.msra.mxu0 0.0
      %1293 = vmatprep.subr.mxu0 0.0
      %1294 = vmatpush1.msra.mxu0 0.0
      %1295 = vmatprep.subr.mxu0 0.0
      %1296 = vmatpush1.msra.mxu0 0.0
      %1297 = vmatprep.subr.mxu0 0.0
      %1298 = vmatpush1.msra.mxu0 0.0
      %1299 = vmatprep.subr.mxu0 0.0
      %1300 = vmatpush1.msra.mxu0 0.0
      %1301 = vmatprep.subr.mxu0 0.0
      %1302 = vmatpush1.msra.mxu0 0.0
      %1303 = vmatprep.subr.mxu0 0.0
      %1304 = vmatpush1.msra.mxu0 0.0
      %1305 = vmatprep.mubr.f32.mxu0 0.0
      %v1306 = vand.u32 %v806, 4294901760
      %1307 = vmatmul.mubr.f32.gmra.mrb[0].mxu0 %v1306
      %v1308 = vpop.f32.mrb[0].mxu0
      %v1309 = vadd.f32 %v1203, %v1308
      %v1310 = vpop.f32.mrb[0].mxu0
      %1311 = vmatprep.mubr.f32.mxu0 0.0
      %v1312 = vand.u32 %v809, 4294901760
      %1313 = vmatmul.mubr.f32.gmra.mrb[0].mxu0 %v1312
      %v1314 = vpop.f32.mrb[0].mxu0
      %v1315 = vadd.f32 %v1211, %v1314
      %v1316 = vpop.f32.mrb[0].mxu0
      %1317 = vdwg.mxu0
      %1318 = vmatprep.subr.mxu0 0.0
      %v1319 = vand.u32 %v184, 4294901760
      %1320 = vmatpush1.msra.mxu0 %v1319
      %1321 = vmatprep.subr.mxu0 0.0
      %v1322 = vand.u32 %v185, 4294901760
      %1323 = vmatpush1.msra.mxu0 %v1322
      %1324 = vmatprep.subr.mxu0 0.0
      %v1325 = vand.u32 %v186, 4294901760
      %1326 = vmatpush1.msra.mxu0 %v1325
      %1327 = vmatprep.subr.mxu0 0.0
      %v1328 = vand.u32 %v187, 4294901760
      %1329 = vmatpush1.msra.mxu0 %v1328
      %1330 = vmatprep.subr.mxu0 0.0
      %v1331 = vand.u32 %v188, 4294901760
      %1332 = vmatpush1.msra.mxu0 %v1331
      %1333 = vmatprep.subr.mxu0 0.0
      %v1334 = vand.u32 %v189, 4294901760
      %1335 = vmatpush1.msra.mxu0 %v1334
      %1336 = vmatprep.subr.mxu0 0.0
      %v1337 = vand.u32 %v190, 4294901760
      %1338 = vmatpush1.msra.mxu0 %v1337
      %1339 = vmatprep.subr.mxu0 0.0
      %v1340 = vand.u32 %v191, 4294901760
      %1341 = vmatpush1.msra.mxu0 %v1340
      %1342 = vmatprep.subr.mxu0 0.0
      %v1343 = vand.u32 %v192, 4294901760
      %1344 = vmatpush1.msra.mxu0 %v1343
      %1345 = vmatprep.subr.mxu0 0.0
      %1346 = vmatpush1.msra.mxu0 0.0
      %1347 = vmatprep.subr.mxu0 0.0
      %1348 = vmatpush1.msra.mxu0 0.0
      %1349 = vmatprep.subr.mxu0 0.0
      %1350 = vmatpush1.msra.mxu0 0.0
      %1351 = vmatprep.subr.mxu0 0.0
      %1352 = vmatpush1.msra.mxu0 0.0
      %1353 = vmatprep.subr.mxu0 0.0
      %1354 = vmatpush1.msra.mxu0 0.0
      %1355 = vmatprep.subr.mxu0 0.0
      %1356 = vmatpush1.msra.mxu0 0.0
      %1357 = vmatprep.subr.mxu0 0.0
      %1358 = vmatpush1.msra.mxu0 0.0
      %1359 = vmatprep.subr.mxu0 0.0
      %1360 = vmatpush1.msra.mxu0 0.0
      %1361 = vmatprep.subr.mxu0 0.0
      %1362 = vmatpush1.msra.mxu0 0.0
      %1363 = vmatprep.subr.mxu0 0.0
      %1364 = vmatpush1.msra.mxu0 0.0
      %1365 = vmatprep.subr.mxu0 0.0
      %1366 = vmatpush1.msra.mxu0 0.0
      %1367 = vmatprep.subr.mxu0 0.0
      %1368 = vmatpush1.msra.mxu0 0.0
      %1369 = vmatprep.subr.mxu0 0.0
      %1370 = vmatpush1.msra.mxu0 0.0
      %1371 = vmatprep.subr.mxu0 0.0
      %1372 = vmatpush1.msra.mxu0 0.0
      %1373 = vmatprep.subr.mxu0 0.0
      %1374 = vmatpush1.msra.mxu0 0.0
      %1375 = vmatprep.subr.mxu0 0.0
      %1376 = vmatpush1.msra.mxu0 0.0
      %1377 = vmatprep.subr.mxu0 0.0
      %1378 = vmatpush1.msra.mxu0 0.0
      %1379 = vmatprep.subr.mxu0 0.0
      %1380 = vmatpush1.msra.mxu0 0.0
      %1381 = vmatprep.subr.mxu0 0.0
      %1382 = vmatpush1.msra.mxu0 0.0
      %1383 = vmatprep.subr.mxu0 0.0
      %1384 = vmatpush1.msra.mxu0 0.0
      %1385 = vmatprep.subr.mxu0 0.0
      %1386 = vmatpush1.msra.mxu0 0.0
      %1387 = vmatprep.subr.mxu0 0.0
      %1388 = vmatpush1.msra.mxu0 0.0
      %1389 = vmatprep.subr.mxu0 0.0
      %1390 = vmatpush1.msra.mxu0 0.0
      %1391 = vmatprep.mubr.f32.mxu0 0.0
      %v1392 = vand.u32 %v806, 4294901760
      %1393 = vmatmul.mubr.f32.gmra.mrb[0].mxu0 %v1392
      %v1394 = vpop.f32.mrb[0].mxu0
      %v1395 = vadd.f32 %v1309, %v1394
      %v1396 = vpop.f32.mrb[0].mxu0
      %1397 = vmatprep.mubr.f32.mxu0 0.0
      %v1398 = vand.u32 %v809, 4294901760
      %1399 = vmatmul.mubr.f32.gmra.mrb[0].mxu0 %v1398
      %v1400 = vpop.f32.mrb[0].mxu0
      %v1401 = vadd.f32 %v1315, %v1400
      %v1402 = vpop.f32.mrb[0].mxu0
      %1403 = vdwg.mxu0
      %v1404 = vld [vmem:[%s172 + $0x2] sm:$0xff]
      %v1405 = vld [vmem:[%s172 + $0xa] sm:$0xff]
      %s1406 = scalar_lea.vmem %s1, 144
      %v1407 = vld [vmem:[%s1406] sm:$0xff]
      %v1408 = vld [vmem:[%s1406 + $0x8] sm:$0xff]
      %v1409 = vld [vmem:[%s1406 + $0x10] sm:$0xff]
      %v1410 = vld [vmem:[%s1406 + $0x18] sm:$0xff]
      %v1411 = vld [vmem:[%s1406 + $0x20] sm:$0xff]
      %v1412 = vld [vmem:[%s1406 + $0x28] sm:$0xff]
      %v1413 = vld [vmem:[%s1406 + $0x30] sm:$0xff]
      %v1414 = vld [vmem:[%s1406 + $0x38] sm:$0xff]
      %v1415 = vld [vmem:[%s1406 + $0x40] sm:$0xff]
      %v1417 = vsel %vm205, %v1404, 0
      %v1420 = vsel %vm205, %v1405, 0
      %1422 = vmatprep.subr.mxu0 0.0
      %v1423 = vand.u32 %v1407, 4294901760
      %1424 = vmatpush1.msra.mxu0 %v1423
      %1425 = vmatprep.subr.mxu0 0.0
      %v1426 = vand.u32 %v1408, 4294901760
      %1427 = vmatpush1.msra.mxu0 %v1426
      %1428 = vmatprep.subr.mxu0 0.0
      %v1429 = vand.u32 %v1409, 4294901760
      %1430 = vmatpush1.msra.mxu0 %v1429
      %1431 = vmatprep.subr.mxu0 0.0
      %v1432 = vand.u32 %v1410, 4294901760
      %1433 = vmatpush1.msra.mxu0 %v1432
      %1434 = vmatprep.subr.mxu0 0.0
      %v1435 = vand.u32 %v1411, 4294901760
      %1436 = vmatpush1.msra.mxu0 %v1435
      %1437 = vmatprep.subr.mxu0 0.0
      %v1438 = vand.u32 %v1412, 4294901760
      %1439 = vmatpush1.msra.mxu0 %v1438
      %1440 = vmatprep.subr.mxu0 0.0
      %v1441 = vand.u32 %v1413, 4294901760
      %1442 = vmatpush1.msra.mxu0 %v1441
      %1443 = vmatprep.subr.mxu0 0.0
      %v1444 = vand.u32 %v1414, 4294901760
      %1445 = vmatpush1.msra.mxu0 %v1444
      %1446 = vmatprep.subr.mxu0 0.0
      %v1447 = vand.u32 %v1415, 4294901760
      %1448 = vmatpush1.msra.mxu0 %v1447
      %1449 = vmatprep.subr.mxu0 0.0
      %1450 = vmatpush1.msra.mxu0 0.0
      %1451 = vmatprep.subr.mxu0 0.0
      %1452 = vmatpush1.msra.mxu0 0.0
      %1453 = vmatprep.subr.mxu0 0.0
      %1454 = vmatpush1.msra.mxu0 0.0
      %1455 = vmatprep.subr.mxu0 0.0
      %1456 = vmatpush1.msra.mxu0 0.0
      %1457 = vmatprep.subr.mxu0 0.0
      %1458 = vmatpush1.msra.mxu0 0.0
      %1459 = vmatprep.subr.mxu0 0.0
      %1460 = vmatpush1.msra.mxu0 0.0
      %1461 = vmatprep.subr.mxu0 0.0
      %1462 = vmatpush1.msra.mxu0 0.0
      %1463 = vmatprep.subr.mxu0 0.0
      %1464 = vmatpush1.msra.mxu0 0.0
      %1465 = vmatprep.subr.mxu0 0.0
      %1466 = vmatpush1.msra.mxu0 0.0
      %1467 = vmatprep.subr.mxu0 0.0
      %1468 = vmatpush1.msra.mxu0 0.0
      %1469 = vmatprep.subr.mxu0 0.0
      %1470 = vmatpush1.msra.mxu0 0.0
      %1471 = vmatprep.subr.mxu0 0.0
      %1472 = vmatpush1.msra.mxu0 0.0
      %1473 = vmatprep.subr.mxu0 0.0
      %1474 = vmatpush1.msra.mxu0 0.0
      %1475 = vmatprep.subr.mxu0 0.0
      %1476 = vmatpush1.msra.mxu0 0.0
      %1477 = vmatprep.subr.mxu0 0.0
      %1478 = vmatpush1.msra.mxu0 0.0
      %1479 = vmatprep.subr.mxu0 0.0
      %1480 = vmatpush1.msra.mxu0 0.0
      %1481 = vmatprep.subr.mxu0 0.0
      %1482 = vmatpush1.msra.mxu0 0.0
      %1483 = vmatprep.subr.mxu0 0.0
      %1484 = vmatpush1.msra.mxu0 0.0
      %1485 = vmatprep.subr.mxu0 0.0
      %1486 = vmatpush1.msra.mxu0 0.0
      %1487 = vmatprep.subr.mxu0 0.0
      %1488 = vmatpush1.msra.mxu0 0.0
      %1489 = vmatprep.subr.mxu0 0.0
      %1490 = vmatpush1.msra.mxu0 0.0
      %1491 = vmatprep.subr.mxu0 0.0
      %1492 = vmatpush1.msra.mxu0 0.0
      %1493 = vmatprep.subr.mxu0 0.0
      %1494 = vmatpush1.msra.mxu0 0.0
      %1495 = vmatprep.mubr.f32.mxu0 0.0
      %v1496 = vand.u32 %v1417, 4294901760
      %v1497 = vsub.f32 %v1417, %v1496
      %v1498 = vand.u32 %v1497, 4294901760
      %v1499 = vsub.f32 %v1497, %v1498
      %v1500 = vand.u32 %v1499, 4294901760
      %1501 = vmatmul.mubr.f32.gmra.mrb[0].mxu0 %v1500
      %v1502 = vpop.f32.mrb[0].mxu0
      %v1503 = vadd.f32 0.0, %v1502
      %v1504 = vpop.f32.mrb[0].mxu0
      %1505 = vmatprep.mubr.f32.mxu0 0.0
      %v1506 = vand.u32 %v1420, 4294901760
      %v1507 = vsub.f32 %v1420, %v1506
      %v1508 = vand.u32 %v1507, 4294901760
      %v1509 = vsub.f32 %v1507, %v1508
      %v1510 = vand.u32 %v1509, 4294901760
      %1511 = vmatmul.mubr.f32.gmra.mrb[0].mxu0 %v1510
      %v1512 = vpop.f32.mrb[0].mxu0
      %v1513 = vadd.f32 0.0, %v1512
      %v1514 = vpop.f32.mrb[0].mxu0
      %1515 = vdwg.mxu0
      %1516 = vmatprep.subr.mxu0 0.0
      %v1517 = vand.u32 %v1407, 4294901760
      %v1518 = vsub.f32 %v1407, %v1517
      %v1519 = vand.u32 %v1518, 4294901760
      %v1520 = vsub.f32 %v1518, %v1519
      %v1521 = vand.u32 %v1520, 4294901760
      %1522 = vmatpush1.msra.mxu0 %v1521
      %1523 = vmatprep.subr.mxu0 0.0
      %v1524 = vand.u32 %v1408, 4294901760
      %v1525 = vsub.f32 %v1408, %v1524
      %v1526 = vand.u32 %v1525, 4294901760
      %v1527 = vsub.f32 %v1525, %v1526
      %v1528 = vand.u32 %v1527, 4294901760
      %1529 = vmatpush1.msra.mxu0 %v1528
      %1530 = vmatprep.subr.mxu0 0.0
      %v1531 = vand.u32 %v1409, 4294901760
      %v1532 = vsub.f32 %v1409, %v1531
      %v1533 = vand.u32 %v1532, 4294901760
      %v1534 = vsub.f32 %v1532, %v1533
      %v1535 = vand.u32 %v1534, 4294901760
      %1536 = vmatpush1.msra.mxu0 %v1535
      %1537 = vmatprep.subr.mxu0 0.0
      %v1538 = vand.u32 %v1410, 4294901760
      %v1539 = vsub.f32 %v1410, %v1538
      %v1540 = vand.u32 %v1539, 4294901760
      %v1541 = vsub.f32 %v1539, %v1540
      %v1542 = vand.u32 %v1541, 4294901760
      %1543 = vmatpush1.msra.mxu0 %v1542
      %1544 = vmatprep.subr.mxu0 0.0
      %v1545 = vand.u32 %v1411, 4294901760
      %v1546 = vsub.f32 %v1411, %v1545
      %v1547 = vand.u32 %v1546, 4294901760
      %v1548 = vsub.f32 %v1546, %v1547
      %v1549 = vand.u32 %v1548, 4294901760
      %1550 = vmatpush1.msra.mxu0 %v1549
      %1551 = vmatprep.subr.mxu0 0.0
      %v1552 = vand.u32 %v1412, 4294901760
      %v1553 = vsub.f32 %v1412, %v1552
      %v1554 = vand.u32 %v1553, 4294901760
      %v1555 = vsub.f32 %v1553, %v1554
      %v1556 = vand.u32 %v1555, 4294901760
      %1557 = vmatpush1.msra.mxu0 %v1556
      %1558 = vmatprep.subr.mxu0 0.0
      %v1559 = vand.u32 %v1413, 4294901760
      %v1560 = vsub.f32 %v1413, %v1559
      %v1561 = vand.u32 %v1560, 4294901760
      %v1562 = vsub.f32 %v1560, %v1561
      %v1563 = vand.u32 %v1562, 4294901760
      %1564 = vmatpush1.msra.mxu0 %v1563
      %1565 = vmatprep.subr.mxu0 0.0
      %v1566 = vand.u32 %v1414, 4294901760
      %v1567 = vsub.f32 %v1414, %v1566
      %v1568 = vand.u32 %v1567, 4294901760
      %v1569 = vsub.f32 %v1567, %v1568
      %v1570 = vand.u32 %v1569, 4294901760
      %1571 = vmatpush1.msra.mxu0 %v1570
      %1572 = vmatprep.subr.mxu0 0.0
      %v1573 = vand.u32 %v1415, 4294901760
      %v1574 = vsub.f32 %v1415, %v1573
      %v1575 = vand.u32 %v1574, 4294901760
      %v1576 = vsub.f32 %v1574, %v1575
      %v1577 = vand.u32 %v1576, 4294901760
      %1578 = vmatpush1.msra.mxu0 %v1577
      %1579 = vmatprep.subr.mxu0 0.0
      %1580 = vmatpush1.msra.mxu0 0.0
      %1581 = vmatprep.subr.mxu0 0.0
      %1582 = vmatpush1.msra.mxu0 0.0
      %1583 = vmatprep.subr.mxu0 0.0
      %1584 = vmatpush1.msra.mxu0 0.0
      %1585 = vmatprep.subr.mxu0 0.0
      %1586 = vmatpush1.msra.mxu0 0.0
      %1587 = vmatprep.subr.mxu0 0.0
      %1588 = vmatpush1.msra.mxu0 0.0
      %1589 = vmatprep.subr.mxu0 0.0
      %1590 = vmatpush1.msra.mxu0 0.0
      %1591 = vmatprep.subr.mxu0 0.0
      %1592 = vmatpush1.msra.mxu0 0.0
      %1593 = vmatprep.subr.mxu0 0.0
      %1594 = vmatpush1.msra.mxu0 0.0
      %1595 = vmatprep.subr.mxu0 0.0
      %1596 = vmatpush1.msra.mxu0 0.0
      %1597 = vmatprep.subr.mxu0 0.0
      %1598 = vmatpush1.msra.mxu0 0.0
      %1599 = vmatprep.subr.mxu0 0.0
      %1600 = vmatpush1.msra.mxu0 0.0
      %1601 = vmatprep.subr.mxu0 0.0
      %1602 = vmatpush1.msra.mxu0 0.0
      %1603 = vmatprep.subr.mxu0 0.0
      %1604 = vmatpush1.msra.mxu0 0.0
      %1605 = vmatprep.subr.mxu0 0.0
      %1606 = vmatpush1.msra.mxu0 0.0
      %1607 = vmatprep.subr.mxu0 0.0
      %1608 = vmatpush1.msra.mxu0 0.0
      %1609 = vmatprep.subr.mxu0 0.0
      %1610 = vmatpush1.msra.mxu0 0.0
      %1611 = vmatprep.subr.mxu0 0.0
      %1612 = vmatpush1.msra.mxu0 0.0
      %1613 = vmatprep.subr.mxu0 0.0
      %1614 = vmatpush1.msra.mxu0 0.0
      %1615 = vmatprep.subr.mxu0 0.0
      %1616 = vmatpush1.msra.mxu0 0.0
      %1617 = vmatprep.subr.mxu0 0.0
      %1618 = vmatpush1.msra.mxu0 0.0
      %1619 = vmatprep.subr.mxu0 0.0
      %1620 = vmatpush1.msra.mxu0 0.0
      %1621 = vmatprep.subr.mxu0 0.0
      %1622 = vmatpush1.msra.mxu0 0.0
      %1623 = vmatprep.subr.mxu0 0.0
      %1624 = vmatpush1.msra.mxu0 0.0
      %1625 = vmatprep.mubr.f32.mxu0 0.0
      %v1626 = vand.u32 %v1417, 4294901760
      %1627 = vmatmul.mubr.f32.gmra.mrb[0].mxu0 %v1626
      %v1628 = vpop.f32.mrb[0].mxu0
      %v1629 = vadd.f32 %v1503, %v1628
      %v1630 = vpop.f32.mrb[0].mxu0
      %1631 = vmatprep.mubr.f32.mxu0 0.0
      %v1632 = vand.u32 %v1420, 4294901760
      %1633 = vmatmul.mubr.f32.gmra.mrb[0].mxu0 %v1632
      %v1634 = vpop.f32.mrb[0].mxu0
      %v1635 = vadd.f32 %v1513, %v1634
      %v1636 = vpop.f32.mrb[0].mxu0
      %1637 = vdwg.mxu0
      %1638 = vmatprep.subr.mxu0 0.0
      %v1639 = vand.u32 %v1407, 4294901760
      %v1640 = vsub.f32 %v1407, %v1639
      %1641 = vmatpush1.msra.mxu0 %v1640
      %1642 = vmatprep.subr.mxu0 0.0
      %v1643 = vand.u32 %v1408, 4294901760
      %v1644 = vsub.f32 %v1408, %v1643
      %1645 = vmatpush1.msra.mxu0 %v1644
      %1646 = vmatprep.subr.mxu0 0.0
      %v1647 = vand.u32 %v1409, 4294901760
      %v1648 = vsub.f32 %v1409, %v1647
      %1649 = vmatpush1.msra.mxu0 %v1648
      %1650 = vmatprep.subr.mxu0 0.0
      %v1651 = vand.u32 %v1410, 4294901760
      %v1652 = vsub.f32 %v1410, %v1651
      %1653 = vmatpush1.msra.mxu0 %v1652
      %1654 = vmatprep.subr.mxu0 0.0
      %v1655 = vand.u32 %v1411, 4294901760
      %v1656 = vsub.f32 %v1411, %v1655
      %1657 = vmatpush1.msra.mxu0 %v1656
      %1658 = vmatprep.subr.mxu0 0.0
      %v1659 = vand.u32 %v1412, 4294901760
      %v1660 = vsub.f32 %v1412, %v1659
      %1661 = vmatpush1.msra.mxu0 %v1660
      %1662 = vmatprep.subr.mxu0 0.0
      %v1663 = vand.u32 %v1413, 4294901760
      %v1664 = vsub.f32 %v1413, %v1663
      %1665 = vmatpush1.msra.mxu0 %v1664
      %1666 = vmatprep.subr.mxu0 0.0
      %v1667 = vand.u32 %v1414, 4294901760
      %v1668 = vsub.f32 %v1414, %v1667
      %1669 = vmatpush1.msra.mxu0 %v1668
      %1670 = vmatprep.subr.mxu0 0.0
      %v1671 = vand.u32 %v1415, 4294901760
      %v1672 = vsub.f32 %v1415, %v1671
      %1673 = vmatpush1.msra.mxu0 %v1672
      %1674 = vmatprep.subr.mxu0 0.0
      %1675 = vmatpush1.msra.mxu0 0.0
      %1676 = vmatprep.subr.mxu0 0.0
      %1677 = vmatpush1.msra.mxu0 0.0
      %1678 = vmatprep.subr.mxu0 0.0
      %1679 = vmatpush1.msra.mxu0 0.0
      %1680 = vmatprep.subr.mxu0 0.0
      %1681 = vmatpush1.msra.mxu0 0.0
      %1682 = vmatprep.subr.mxu0 0.0
      %1683 = vmatpush1.msra.mxu0 0.0
      %1684 = vmatprep.subr.mxu0 0.0
      %1685 = vmatpush1.msra.mxu0 0.0
      %1686 = vmatprep.subr.mxu0 0.0
      %1687 = vmatpush1.msra.mxu0 0.0
      %1688 = vmatprep.subr.mxu0 0.0
      %1689 = vmatpush1.msra.mxu0 0.0
      %1690 = vmatprep.subr.mxu0 0.0
      %1691 = vmatpush1.msra.mxu0 0.0
      %1692 = vmatprep.subr.mxu0 0.0
      %1693 = vmatpush1.msra.mxu0 0.0
      %1694 = vmatprep.subr.mxu0 0.0
      %1695 = vmatpush1.msra.mxu0 0.0
      %1696 = vmatprep.subr.mxu0 0.0
      %1697 = vmatpush1.msra.mxu0 0.0
      %1698 = vmatprep.subr.mxu0 0.0
      %1699 = vmatpush1.msra.mxu0 0.0
      %1700 = vmatprep.subr.mxu0 0.0
      %1701 = vmatpush1.msra.mxu0 0.0
      %1702 = vmatprep.subr.mxu0 0.0
      %1703 = vmatpush1.msra.mxu0 0.0
      %1704 = vmatprep.subr.mxu0 0.0
      %1705 = vmatpush1.msra.mxu0 0.0
      %1706 = vmatprep.subr.mxu0 0.0
      %1707 = vmatpush1.msra.mxu0 0.0
      %1708 = vmatprep.subr.mxu0 0.0
      %1709 = vmatpush1.msra.mxu0 0.0
      %1710 = vmatprep.subr.mxu0 0.0
      %1711 = vmatpush1.msra.mxu0 0.0
      %1712 = vmatprep.subr.mxu0 0.0
      %1713 = vmatpush1.msra.mxu0 0.0
      %1714 = vmatprep.subr.mxu0 0.0
      %1715 = vmatpush1.msra.mxu0 0.0
      %1716 = vmatprep.subr.mxu0 0.0
      %1717 = vmatpush1.msra.mxu0 0.0
      %1718 = vmatprep.subr.mxu0 0.0
      %1719 = vmatpush1.msra.mxu0 0.0
      %1720 = vmatprep.mubr.f32.mxu0 0.0
      %v1721 = vand.u32 %v1417, 4294901760
      %v1722 = vsub.f32 %v1417, %v1721
      %1723 = vmatmul.mubr.f32.gmra.mrb[0].mxu0 %v1722
      %v1724 = vpop.f32.mrb[0].mxu0
      %v1725 = vadd.f32 %v1629, %v1724
      %v1726 = vpop.f32.mrb[0].mxu0
      %1727 = vmatprep.mubr.f32.mxu0 0.0
      %v1728 = vand.u32 %v1420, 4294901760
      %v1729 = vsub.f32 %v1420, %v1728
      %1730 = vmatmul.mubr.f32.gmra.mrb[0].mxu0 %v1729
      %v1731 = vpop.f32.mrb[0].mxu0
      %v1732 = vadd.f32 %v1635, %v1731
      %v1733 = vpop.f32.mrb[0].mxu0
      %1734 = vdwg.mxu0
      %1735 = vmatprep.subr.mxu0 0.0
      %v1736 = vand.u32 %v1407, 4294901760
      %1737 = vmatpush1.msra.mxu0 %v1736
      %1738 = vmatprep.subr.mxu0 0.0
      %v1739 = vand.u32 %v1408, 4294901760
      %1740 = vmatpush1.msra.mxu0 %v1739
      %1741 = vmatprep.subr.mxu0 0.0
      %v1742 = vand.u32 %v1409, 4294901760
      %1743 = vmatpush1.msra.mxu0 %v1742
      %1744 = vmatprep.subr.mxu0 0.0
      %v1745 = vand.u32 %v1410, 4294901760
      %1746 = vmatpush1.msra.mxu0 %v1745
      %1747 = vmatprep.subr.mxu0 0.0
      %v1748 = vand.u32 %v1411, 4294901760
      %1749 = vmatpush1.msra.mxu0 %v1748
      %1750 = vmatprep.subr.mxu0 0.0
      %v1751 = vand.u32 %v1412, 4294901760
      %1752 = vmatpush1.msra.mxu0 %v1751
      %1753 = vmatprep.subr.mxu0 0.0
      %v1754 = vand.u32 %v1413, 4294901760
      %1755 = vmatpush1.msra.mxu0 %v1754
      %1756 = vmatprep.subr.mxu0 0.0
      %v1757 = vand.u32 %v1414, 4294901760
      %1758 = vmatpush1.msra.mxu0 %v1757
      %1759 = vmatprep.subr.mxu0 0.0
      %v1760 = vand.u32 %v1415, 4294901760
      %1761 = vmatpush1.msra.mxu0 %v1760
      %1762 = vmatprep.subr.mxu0 0.0
      %1763 = vmatpush1.msra.mxu0 0.0
      %1764 = vmatprep.subr.mxu0 0.0
      %1765 = vmatpush1.msra.mxu0 0.0
      %1766 = vmatprep.subr.mxu0 0.0
      %1767 = vmatpush1.msra.mxu0 0.0
      %1768 = vmatprep.subr.mxu0 0.0
      %1769 = vmatpush1.msra.mxu0 0.0
      %1770 = vmatprep.subr.mxu0 0.0
      %1771 = vmatpush1.msra.mxu0 0.0
      %1772 = vmatprep.subr.mxu0 0.0
      %1773 = vmatpush1.msra.mxu0 0.0
      %1774 = vmatprep.subr.mxu0 0.0
      %1775 = vmatpush1.msra.mxu0 0.0
      %1776 = vmatprep.subr.mxu0 0.0
      %1777 = vmatpush1.msra.mxu0 0.0
      %1778 = vmatprep.subr.mxu0 0.0
      %1779 = vmatpush1.msra.mxu0 0.0
      %1780 = vmatprep.subr.mxu0 0.0
      %1781 = vmatpush1.msra.mxu0 0.0
      %1782 = vmatprep.subr.mxu0 0.0
      %1783 = vmatpush1.msra.mxu0 0.0
      %1784 = vmatprep.subr.mxu0 0.0
      %1785 = vmatpush1.msra.mxu0 0.0
      %1786 = vmatprep.subr.mxu0 0.0
      %1787 = vmatpush1.msra.mxu0 0.0
      %1788 = vmatprep.subr.mxu0 0.0
      %1789 = vmatpush1.msra.mxu0 0.0
      %1790 = vmatprep.subr.mxu0 0.0
      %1791 = vmatpush1.msra.mxu0 0.0
      %1792 = vmatprep.subr.mxu0 0.0
      %1793 = vmatpush1.msra.mxu0 0.0
      %1794 = vmatprep.subr.mxu0 0.0
      %1795 = vmatpush1.msra.mxu0 0.0
      %1796 = vmatprep.subr.mxu0 0.0
      %1797 = vmatpush1.msra.mxu0 0.0
      %1798 = vmatprep.subr.mxu0 0.0
      %1799 = vmatpush1.msra.mxu0 0.0
      %1800 = vmatprep.subr.mxu0 0.0
      %1801 = vmatpush1.msra.mxu0 0.0
      %1802 = vmatprep.subr.mxu0 0.0
      %1803 = vmatpush1.msra.mxu0 0.0
      %1804 = vmatprep.subr.mxu0 0.0
      %1805 = vmatpush1.msra.mxu0 0.0
      %1806 = vmatprep.subr.mxu0 0.0
      %1807 = vmatpush1.msra.mxu0 0.0
      %1808 = vmatprep.mubr.f32.mxu0 0.0
      %v1809 = vand.u32 %v1417, 4294901760
      %v1810 = vsub.f32 %v1417, %v1809
      %v1811 = vand.u32 %v1810, 4294901760
      %1812 = vmatmul.mubr.f32.gmra.mrb[0].mxu0 %v1811
      %v1813 = vpop.f32.mrb[0].mxu0
      %v1814 = vadd.f32 %v1725, %v1813
      %v1815 = vpop.f32.mrb[0].mxu0
      %1816 = vmatprep.mubr.f32.mxu0 0.0
      %v1817 = vand.u32 %v1420, 4294901760
      %v1818 = vsub.f32 %v1420, %v1817
      %v1819 = vand.u32 %v1818, 4294901760
      %1820 = vmatmul.mubr.f32.gmra.mrb[0].mxu0 %v1819
      %v1821 = vpop.f32.mrb[0].mxu0
      %v1822 = vadd.f32 %v1732, %v1821
      %v1823 = vpop.f32.mrb[0].mxu0
      %1824 = vdwg.mxu0
      %1825 = vmatprep.subr.mxu0 0.0
      %v1826 = vand.u32 %v1407, 4294901760
      %v1827 = vsub.f32 %v1407, %v1826
      %v1828 = vand.u32 %v1827, 4294901760
      %1829 = vmatpush1.msra.mxu0 %v1828
      %1830 = vmatprep.subr.mxu0 0.0
      %v1831 = vand.u32 %v1408, 4294901760
      %v1832 = vsub.f32 %v1408, %v1831
      %v1833 = vand.u32 %v1832, 4294901760
      %1834 = vmatpush1.msra.mxu0 %v1833
      %1835 = vmatprep.subr.mxu0 0.0
      %v1836 = vand.u32 %v1409, 4294901760
      %v1837 = vsub.f32 %v1409, %v1836
      %v1838 = vand.u32 %v1837, 4294901760
      %1839 = vmatpush1.msra.mxu0 %v1838
      %1840 = vmatprep.subr.mxu0 0.0
      %v1841 = vand.u32 %v1410, 4294901760
      %v1842 = vsub.f32 %v1410, %v1841
      %v1843 = vand.u32 %v1842, 4294901760
      %1844 = vmatpush1.msra.mxu0 %v1843
      %1845 = vmatprep.subr.mxu0 0.0
      %v1846 = vand.u32 %v1411, 4294901760
      %v1847 = vsub.f32 %v1411, %v1846
      %v1848 = vand.u32 %v1847, 4294901760
      %1849 = vmatpush1.msra.mxu0 %v1848
      %1850 = vmatprep.subr.mxu0 0.0
      %v1851 = vand.u32 %v1412, 4294901760
      %v1852 = vsub.f32 %v1412, %v1851
      %v1853 = vand.u32 %v1852, 4294901760
      %1854 = vmatpush1.msra.mxu0 %v1853
      %1855 = vmatprep.subr.mxu0 0.0
      %v1856 = vand.u32 %v1413, 4294901760
      %v1857 = vsub.f32 %v1413, %v1856
      %v1858 = vand.u32 %v1857, 4294901760
      %1859 = vmatpush1.msra.mxu0 %v1858
      %1860 = vmatprep.subr.mxu0 0.0
      %v1861 = vand.u32 %v1414, 4294901760
      %v1862 = vsub.f32 %v1414, %v1861
      %v1863 = vand.u32 %v1862, 4294901760
      %1864 = vmatpush1.msra.mxu0 %v1863
      %1865 = vmatprep.subr.mxu0 0.0
      %v1866 = vand.u32 %v1415, 4294901760
      %v1867 = vsub.f32 %v1415, %v1866
      %v1868 = vand.u32 %v1867, 4294901760
      %1869 = vmatpush1.msra.mxu0 %v1868
      %1870 = vmatprep.subr.mxu0 0.0
      %1871 = vmatpush1.msra.mxu0 0.0
      %1872 = vmatprep.subr.mxu0 0.0
      %1873 = vmatpush1.msra.mxu0 0.0
      %1874 = vmatprep.subr.mxu0 0.0
      %1875 = vmatpush1.msra.mxu0 0.0
      %1876 = vmatprep.subr.mxu0 0.0
      %1877 = vmatpush1.msra.mxu0 0.0
      %1878 = vmatprep.subr.mxu0 0.0
      %1879 = vmatpush1.msra.mxu0 0.0
      %1880 = vmatprep.subr.mxu0 0.0
      %1881 = vmatpush1.msra.mxu0 0.0
      %1882 = vmatprep.subr.mxu0 0.0
      %1883 = vmatpush1.msra.mxu0 0.0
      %1884 = vmatprep.subr.mxu0 0.0
      %1885 = vmatpush1.msra.mxu0 0.0
      %1886 = vmatprep.subr.mxu0 0.0
      %1887 = vmatpush1.msra.mxu0 0.0
      %1888 = vmatprep.subr.mxu0 0.0
      %1889 = vmatpush1.msra.mxu0 0.0
      %1890 = vmatprep.subr.mxu0 0.0
      %1891 = vmatpush1.msra.mxu0 0.0
      %1892 = vmatprep.subr.mxu0 0.0
      %1893 = vmatpush1.msra.mxu0 0.0
      %1894 = vmatprep.subr.mxu0 0.0
      %1895 = vmatpush1.msra.mxu0 0.0
      %1896 = vmatprep.subr.mxu0 0.0
      %1897 = vmatpush1.msra.mxu0 0.0
      %1898 = vmatprep.subr.mxu0 0.0
      %1899 = vmatpush1.msra.mxu0 0.0
      %1900 = vmatprep.subr.mxu0 0.0
      %1901 = vmatpush1.msra.mxu0 0.0
      %1902 = vmatprep.subr.mxu0 0.0
      %1903 = vmatpush1.msra.mxu0 0.0
      %1904 = vmatprep.subr.mxu0 0.0
      %1905 = vmatpush1.msra.mxu0 0.0
      %1906 = vmatprep.subr.mxu0 0.0
      %1907 = vmatpush1.msra.mxu0 0.0
      %1908 = vmatprep.subr.mxu0 0.0
      %1909 = vmatpush1.msra.mxu0 0.0
      %1910 = vmatprep.subr.mxu0 0.0
      %1911 = vmatpush1.msra.mxu0 0.0
      %1912 = vmatprep.subr.mxu0 0.0
      %1913 = vmatpush1.msra.mxu0 0.0
      %1914 = vmatprep.subr.mxu0 0.0
      %1915 = vmatpush1.msra.mxu0 0.0
      %1916 = vmatprep.mubr.f32.mxu0 0.0
      %v1917 = vand.u32 %v1417, 4294901760
      %1918 = vmatmul.mubr.f32.gmra.mrb[0].mxu0 %v1917
      %v1919 = vpop.f32.mrb[0].mxu0
      %v1920 = vadd.f32 %v1814, %v1919
      %v1921 = vpop.f32.mrb[0].mxu0
      %1922 = vmatprep.mubr.f32.mxu0 0.0
      %v1923 = vand.u32 %v1420, 4294901760
      %1924 = vmatmul.mubr.f32.gmra.mrb[0].mxu0 %v1923
      %v1925 = vpop.f32.mrb[0].mxu0
      %v1926 = vadd.f32 %v1822, %v1925
      %v1927 = vpop.f32.mrb[0].mxu0
      %1928 = vdwg.mxu0
      %1929 = vmatprep.subr.mxu0 0.0
      %v1930 = vand.u32 %v1407, 4294901760
      %1931 = vmatpush1.msra.mxu0 %v1930
      %1932 = vmatprep.subr.mxu0 0.0
      %v1933 = vand.u32 %v1408, 4294901760
      %1934 = vmatpush1.msra.mxu0 %v1933
      %1935 = vmatprep.subr.mxu0 0.0
      %v1936 = vand.u32 %v1409, 4294901760
      %1937 = vmatpush1.msra.mxu0 %v1936
      %1938 = vmatprep.subr.mxu0 0.0
      %v1939 = vand.u32 %v1410, 4294901760
      %1940 = vmatpush1.msra.mxu0 %v1939
      %1941 = vmatprep.subr.mxu0 0.0
      %v1942 = vand.u32 %v1411, 4294901760
      %1943 = vmatpush1.msra.mxu0 %v1942
      %1944 = vmatprep.subr.mxu0 0.0
      %v1945 = vand.u32 %v1412, 4294901760
      %1946 = vmatpush1.msra.mxu0 %v1945
      %1947 = vmatprep.subr.mxu0 0.0
      %v1948 = vand.u32 %v1413, 4294901760
      %1949 = vmatpush1.msra.mxu0 %v1948
      %1950 = vmatprep.subr.mxu0 0.0
      %v1951 = vand.u32 %v1414, 4294901760
      %1952 = vmatpush1.msra.mxu0 %v1951
      %1953 = vmatprep.subr.mxu0 0.0
      %v1954 = vand.u32 %v1415, 4294901760
      %1955 = vmatpush1.msra.mxu0 %v1954
      %1956 = vmatprep.subr.mxu0 0.0
      %1957 = vmatpush1.msra.mxu0 0.0
      %1958 = vmatprep.subr.mxu0 0.0
      %1959 = vmatpush1.msra.mxu0 0.0
      %1960 = vmatprep.subr.mxu0 0.0
      %1961 = vmatpush1.msra.mxu0 0.0
      %1962 = vmatprep.subr.mxu0 0.0
      %1963 = vmatpush1.msra.mxu0 0.0
      %1964 = vmatprep.subr.mxu0 0.0
      %1965 = vmatpush1.msra.mxu0 0.0
      %1966 = vmatprep.subr.mxu0 0.0
      %1967 = vmatpush1.msra.mxu0 0.0
      %1968 = vmatprep.subr.mxu0 0.0
      %1969 = vmatpush1.msra.mxu0 0.0
      %1970 = vmatprep.subr.mxu0 0.0
      %1971 = vmatpush1.msra.mxu0 0.0
      %1972 = vmatprep.subr.mxu0 0.0
      %1973 = vmatpush1.msra.mxu0 0.0
      %1974 = vmatprep.subr.mxu0 0.0
      %1975 = vmatpush1.msra.mxu0 0.0
      %1976 = vmatprep.subr.mxu0 0.0
      %1977 = vmatpush1.msra.mxu0 0.0
      %1978 = vmatprep.subr.mxu0 0.0
      %1979 = vmatpush1.msra.mxu0 0.0
      %1980 = vmatprep.subr.mxu0 0.0
      %1981 = vmatpush1.msra.mxu0 0.0
      %1982 = vmatprep.subr.mxu0 0.0
      %1983 = vmatpush1.msra.mxu0 0.0
      %1984 = vmatprep.subr.mxu0 0.0
      %1985 = vmatpush1.msra.mxu0 0.0
      %1986 = vmatprep.subr.mxu0 0.0
      %1987 = vmatpush1.msra.mxu0 0.0
      %1988 = vmatprep.subr.mxu0 0.0
      %1989 = vmatpush1.msra.mxu0 0.0
      %1990 = vmatprep.subr.mxu0 0.0
      %1991 = vmatpush1.msra.mxu0 0.0
      %1992 = vmatprep.subr.mxu0 0.0
      %1993 = vmatpush1.msra.mxu0 0.0
      %1994 = vmatprep.subr.mxu0 0.0
      %1995 = vmatpush1.msra.mxu0 0.0
      %1996 = vmatprep.subr.mxu0 0.0
      %1997 = vmatpush1.msra.mxu0 0.0
      %1998 = vmatprep.subr.mxu0 0.0
      %1999 = vmatpush1.msra.mxu0 0.0
      %2000 = vmatprep.subr.mxu0 0.0
      %2001 = vmatpush1.msra.mxu0 0.0
      %2002 = vmatprep.mubr.f32.mxu0 0.0
      %v2003 = vand.u32 %v1417, 4294901760
      %2004 = vmatmul.mubr.f32.gmra.mrb[0].mxu0 %v2003
      %v2005 = vpop.f32.mrb[0].mxu0
      %v2006 = vadd.f32 %v1920, %v2005
      %v2007 = vpop.f32.mrb[0].mxu0
      %2008 = vmatprep.mubr.f32.mxu0 0.0
      %v2009 = vand.u32 %v1420, 4294901760
      %2010 = vmatmul.mubr.f32.gmra.mrb[0].mxu0 %v2009
      %v2011 = vpop.f32.mrb[0].mxu0
      %v2012 = vadd.f32 %v1926, %v2011
      %v2013 = vpop.f32.mrb[0].mxu0
      %2014 = vdwg.mxu0
      %v2015 = vadd.f32 %v1395, %v2006
      %v2016 = vadd.f32 %v1401, %v2012
      %vm2017 = vcmask 523264
      %2018 = vst.msk [vmem:[%s177] sm:$0xff] %vm2017, %v2015
      %2019 = vst.msk [vmem:[%s177 + $0x8] sm:$0xff] %vm2017, %v2016
      %v2020 = vsel %vm2017, %v2015, 0.0
      %v2021 = vsel %vm2017, %v2016, 0.0
      %v2022 = vadd.f32 %v2020, %v2021
      %v2023 = vrot.slane %v2022, 4
      %v2024 = vadd.f32 %v2022, %v2023
      %v2025 = vrot.slane %v2024, 2
      %v2026 = vadd.f32 %v2024, %v2025
      %v2027 = vrot.slane %v2026, 1
      %v2028 = vadd.f32 %v2026, %v2027
      %vm2029 = vcmask 516096
      %2030 = vst.msk [vmem:[%s181] sm:$0x1] %vm2029, %v2028
      %v2031 = vmul.f32 %v2015, %v2015
      %v2032 = vmul.f32 %v2016, %v2016
      %v2033 = vsel %vm2017, %v2031, 0.0
      %v2034 = vsel %vm2017, %v2032, 0.0
      %v2035 = vadd.f32 %v2033, %v2034
      %v2036 = vrot.slane %v2035, 4
      %v2037 = vadd.f32 %v2035, %v2036
      %v2038 = vrot.slane %v2037, 2
      %v2039 = vadd.f32 %v2037, %v2038
      %v2040 = vrot.slane %v2039, 1
      %v2041 = vadd.f32 %v2039, %v2040
      %2042 = vst.msk [vmem:[%s181 + $0x1] sm:$0x1] %vm2029, %v2041
      %p2043 = scmp.lt.s32.totalorder %s15, 1
      %s2044 = scalar_select %p2043, %s15, 1
      %s2045 = smul.addr %s2044, 2
      %s2046 = smul.addr %s2045, 8
      %s2047 = scalar_lea.vmem %s2, %s2046
      %p2048 = scmp.lt.s32.totalorder %s15, 1
      %s2049 = scalar_select %p2048, %s15, 1
      %s2050 = smul.addr %s2049, 2
      %s2051 = scalar_lea.vmem %s3, %s2050
      // Predicated region
      $region29: #{enc_block_forward.2} parent=27 // pred_check
        %p2052 = pneg %p80
      $region30: #{enc_block_forward.2} parent=27 // pred_check_branch
        %2054 = sbr.rel (%p2052) target = $region32
      $region31: #{enc_block_forward.2} parent=27 // pred_region
        _
      $region32: #{enc_block_forward.2} parent=27 // pred_fallthru
        _
      // Predicated region
      $region33: #{enc_block_forward.2} parent=27 // pred_check
        %p2055 = pneg %p106
      $region34: #{enc_block_forward.2} parent=27 // pred_check_branch
        %2057 = sbr.rel (%p2055) target = $region36
      $region35: #{enc_block_forward.2} parent=27 // pred_region
        _
      $region36: #{enc_block_forward.2} parent=27 // pred_fallthru
        _
    $region28: #{enc_block_forward.2} parent=5 // pred_fallthru
      _
    %p2058 = scmp.le.s32.totalorder 2, %s10
    // Predicated region
    $region37: #{enc_block_forward.2} parent=5 // pred_check
      %p2059 = pneg %p2058
    $region38: #{enc_block_forward.2} parent=5 // pred_check_branch
      %2061 = sbr.rel (%p2059) target = $region40
    $region39: #{enc_block_forward.2} parent=5 // pred_region
      %s2062 = ssub.s32 %s10, 2
      // Predicated region
      $region41: #{enc_block_forward.2} parent=39 // pred_check
        %p2063 = pneg %p86
      $region42: #{enc_block_forward.2} parent=39 // pred_check_branch
        %2065 = sbr.rel (%p2063) target = $region44
      $region43: #{enc_block_forward.2} parent=39 // pred_region
        %p2066 = scmp.lt.s32.totalorder %s16, 1
        %s2067 = scalar_select %p2066, %s16, 1
        %s2068 = smul.addr %s2067, 2
        %s2069 = smul.addr %s2068, 8
        %s2070 = scalar_lea.vmem %s2, %s2069
      $region44: #{enc_block_forward.2} parent=39 // pred_fallthru
        _
      // Predicated region
      $region45: #{enc_block_forward.2} parent=39 // pred_check
        %p2071 = pneg %p112
      $region46: #{enc_block_forward.2} parent=39 // pred_check_branch
        %2073 = sbr.rel (%p2071) target = $region48
      $region47: #{enc_block_forward.2} parent=39 // pred_region
        %p2074 = scmp.lt.s32.totalorder %s16, 1
        %s2075 = scalar_select %p2074, %s16, 1
        %s2076 = smul.addr %s2075, 2
        %s2077 = scalar_lea.vmem %s3, %s2076
      $region48: #{enc_block_forward.2} parent=39 // pred_fallthru
        _
    $region40: #{enc_block_forward.2} parent=5 // pred_fallthru
      _
  $region6: #{enc_block_forward.2} parent=0 // loop_footer
    %s14 = sadd.s32 1, %s10
  $region7: #{enc_block_forward.2} parent=0 // loop_footer_branch
    %9 = sbr.rel target = $region3
  $region8: #{enc_block_forward.2} parent=0 // loop_exit
    _

// kernel: enc_block_forward.3
$region0: #{enc_block_forward.3}
  #allocation0 [shape = 'u32[]', space=smem, size = 0x4, offset = 0x4, fixed_abs, tag = 'smem constant byte address 0x4 - core index']
  #allocation1 [shape = 'u32[144,128]{1,0:T(1,128)}', space=vmem, size = 0x12000, scoped, tag = 'internal scratch']
  %s0 = inlined_call_operand.vmem [shape: f32[2,16,64], index: 0, kind: input, shape index: {}]
  %s1 = inlined_call_operand.vmem [shape: f32[2,16,64], index: 1, kind: input, shape index: {}]
  %s2 = inlined_call_operand.vmem [shape: f32[1,64], index: 2, kind: input, shape index: {}]
  %s3 = inlined_call_operand.vmem [shape: f32[1,64], index: 3, kind: input, shape index: {}]
  %s4 = inlined_call_operand.vmem [shape: f32[2,16,128], index: 4, kind: output, shape index: {}]
  %s5 = sld [smem:[#allocation0]]
  $region49: #{enc_block_forward.3} parent=0
    _
  %s7 = ssub.s32 1, %s5
  %s8 = scalar_select 0, %s7, %s5
  loop: start=0, step=1, limit=6
  $region2: #{enc_block_forward.3} parent=0 // loop_pre_header
    _
  $region3: #{enc_block_forward.3} parent=0 // loop_header
    %s10 = sphi 0, %s14
    %p11 = scmp.ge.s32.totalorder %s10, 6
    %s17 = sphi 0, %s29
    %s18 = sphi 0, %s25
    %s19 = sphi 0, %s17
    %s20 = sphi 0, %s18
    %s21 = sphi 0, %s19
    %s22 = sphi 0, %s20
    %s34 = sphi 0, %s36
    %s37 = sphi 0, %s34
    %s38 = sphi 0, %s37
    %s54 = sphi 0, %s38
    %s62 = sphi 0, %s64
    %s65 = sphi 0, %s62
    %s66 = sphi 0, %s65
    %s82 = sphi 0, %s66
    %s86 = sphi 0, %s86
    %s88 = sphi 0, %s86
    %s89 = sphi 0, %s88
    %s103 = sphi 0, %s89
    %s107 = sphi 0, %s107
    %s109 = sphi 0, %s107
    %s110 = sphi 0, %s109
    %s124 = sphi 0, %s110
    %s132 = sphi 0, %s134
    %s135 = sphi 0, %s132
    %s136 = sphi 0, %s135
    %s152 = sphi 0, %s136
  $region4: #{enc_block_forward.3} parent=0 // loop_header_branch
    %13 = sbr.rel (%p11) target = $region8
  $region5: #{enc_block_forward.3} parent=0 // loop_body
    %s15 = ssub.s32 %s10, 1
    %s16 = ssub.s32 %s10, 2
    %s23 = sadd.s32 1, %s18
    %p24 = scmp.ge.s32.totalorder %s23, 2
    %s25 = scalar_select %p24, 0, %s23
    %s26 = sadd.s32 1, %s17
    %s27 = scalar_select %p24, %s26, %s17
    %p28 = scmp.ge.s32.totalorder %s27, 2
    %s29 = scalar_select %p28, 0, %s27
    %s30 = ssub.s32 %s17, %s29
    %s31 = ssub.s32 %s18, %s25
    %s32 = sor.u32 %s30, %s31
    %p33 = scmp.eq.s32.totalorder %s32, 0
    %s35 = sadd.s32 %s34, 1
    %s36 = scalar_select %p33, %s34, %s35
    %p39 = pneg %p33
    %p40 = scmp.eq.s32.totalorder %s10, 3
    %p41 = por %p39, %p40
    %p42 = scmp.ne.s32.totalorder %s34, %s37
    %p43 = scmp.eq.s32.totalorder %s10, 0
    %p44 = por %p42, %p43
    %p45 = scmp.ne.s32.totalorder %s34, %s37
    %p46 = scmp.eq.s32.totalorder %s15, 3
    %p47 = por %p45, %p46
    %p48 = scmp.ne.s32.totalorder %s37, %s38
    %p49 = scmp.eq.s32.totalorder %s15, 0
    %p50 = por %p48, %p49
    %p51 = scmp.ne.s32.totalorder %s37, %s38
    %p52 = scmp.eq.s32.totalorder %s16, 3
    %p53 = por %p51, %p52
    %p55 = scmp.ne.s32.totalorder %s38, %s54
    %p56 = scmp.eq.s32.totalorder %s16, 0
    %p57 = por %p55, %p56
    %s58 = ssub.s32 %s17, %s29
    %s59 = ssub.s32 %s18, %s25
    %s60 = sor.u32 %s58, %s59
    %p61 = scmp.eq.s32.totalorder %s60, 0
    %s63 = sadd.s32 %s62, 1
    %s64 = scalar_select %p61, %s62, %s63
    %p67 = pneg %p61
    %p68 = scmp.eq.s32.totalorder %s10, 3
    %p69 = por %p67, %p68
    %p70 = scmp.ne.s32.totalorder %s62, %s65
    %p71 = scmp.eq.s32.totalorder %s10, 0
    %p72 = por %p70, %p71
    %p73 = scmp.ne.s32.totalorder %s62, %s65
    %p74 = scmp.eq.s32.totalorder %s15, 3
    %p75 = por %p73, %p74
    %p76 = scmp.ne.s32.totalorder %s65, %s66
    %p77 = scmp.eq.s32.totalorder %s15, 0
    %p78 = por %p76, %p77
    %p79 = scmp.ne.s32.totalorder %s65, %s66
    %p80 = scmp.eq.s32.totalorder %s16, 3
    %p81 = por %p79, %p80
    %p83 = scmp.ne.s32.totalorder %s66, %s82
    %p84 = scmp.eq.s32.totalorder %s16, 0
    %p85 = por %p83, %p84
    %s87 = sadd.s32 %s86, 1
    %p90 = scmp.eq.s32.totalorder %s10, 3
    %p91 = scmp.ne.s32.totalorder %s86, %s88
    %p92 = scmp.eq.s32.totalorder %s10, 0
    %p93 = por %p91, %p92
    %p94 = scmp.ne.s32.totalorder %s86, %s88
    %p95 = scmp.eq.s32.totalorder %s15, 3
    %p96 = por %p94, %p95
    %p97 = scmp.ne.s32.totalorder %s88, %s89
    %p98 = scmp.eq.s32.totalorder %s15, 0
    %p99 = por %p97, %p98
    %p100 = scmp.ne.s32.totalorder %s88, %s89
    %p101 = scmp.eq.s32.totalorder %s16, 3
    %p102 = por %p100, %p101
    %p104 = scmp.ne.s32.totalorder %s89, %s103
    %p105 = scmp.eq.s32.totalorder %s16, 0
    %p106 = por %p104, %p105
    %s108 = sadd.s32 %s107, 1
    %p111 = scmp.eq.s32.totalorder %s10, 3
    %p112 = scmp.ne.s32.totalorder %s107, %s109
    %p113 = scmp.eq.s32.totalorder %s10, 0
    %p114 = por %p112, %p113
    %p115 = scmp.ne.s32.totalorder %s107, %s109
    %p116 = scmp.eq.s32.totalorder %s15, 3
    %p117 = por %p115, %p116
    %p118 = scmp.ne.s32.totalorder %s109, %s110
    %p119 = scmp.eq.s32.totalorder %s15, 0
    %p120 = por %p118, %p119
    %p121 = scmp.ne.s32.totalorder %s109, %s110
    %p122 = scmp.eq.s32.totalorder %s16, 3
    %p123 = por %p121, %p122
    %p125 = scmp.ne.s32.totalorder %s110, %s124
    %p126 = scmp.eq.s32.totalorder %s16, 0
    %p127 = por %p125, %p126
    %s128 = ssub.s32 %s17, %s29
    %s129 = ssub.s32 %s18, %s25
    %s130 = sor.u32 %s128, %s129
    %p131 = scmp.eq.s32.totalorder %s130, 0
    %s133 = sadd.s32 %s132, 1
    %s134 = scalar_select %p131, %s132, %s133
    %p137 = pneg %p131
    %p138 = scmp.eq.s32.totalorder %s10, 3
    %p139 = por %p137, %p138
    %p140 = scmp.ne.s32.totalorder %s132, %s135
    %p141 = scmp.eq.s32.totalorder %s10, 0
    %p142 = por %p140, %p141
    %p143 = scmp.ne.s32.totalorder %s132, %s135
    %p144 = scmp.eq.s32.totalorder %s15, 3
    %p145 = por %p143, %p144
    %p146 = scmp.ne.s32.totalorder %s135, %s136
    %p147 = scmp.eq.s32.totalorder %s15, 0
    %p148 = por %p146, %p147
    %p149 = scmp.ne.s32.totalorder %s135, %s136
    %p150 = scmp.eq.s32.totalorder %s16, 3
    %p151 = por %p149, %p150
    %p153 = scmp.ne.s32.totalorder %s136, %s152
    %p154 = scmp.eq.s32.totalorder %s16, 0
    %p155 = por %p153, %p154
    %p156 = scmp.le.s32.totalorder 1, %s10
    %p157 = scmp.lt.s32.totalorder %s10, 5
    %p158 = pnand %p156, %p157
    %p159 = pneg %p158
    // Predicated region
    $region9: #{enc_block_forward.3} parent=5 // pred_check
      _
    $region10: #{enc_block_forward.3} parent=5 // pred_check_branch
      %161 = sbr.rel (%p158) target = $region12
    $region11: #{enc_block_forward.3} parent=5 // pred_region
      %s162 = ssub.s32 %s10, 1
      // Predicated region
      $region13: #{enc_block_forward.3} parent=11 // pred_check
        %p163 = pneg %p99
      $region14: #{enc_block_forward.3} parent=11 // pred_check_branch
        %165 = sbr.rel (%p163) target = $region16
      $region15: #{enc_block_forward.3} parent=11 // pred_region
        _
      $region16: #{enc_block_forward.3} parent=11 // pred_fallthru
        _
      // Predicated region
      $region17: #{enc_block_forward.3} parent=11 // pred_check
        %p166 = pneg %p120
      $region18: #{enc_block_forward.3} parent=11 // pred_check_branch
        %168 = sbr.rel (%p166) target = $region20
      $region19: #{enc_block_forward.3} parent=11 // pred_region
        _
      $region20: #{enc_block_forward.3} parent=11 // pred_fallthru
        _
    $region12: #{enc_block_forward.3} parent=5 // pred_fallthru
      _
    %p169 = scmp.lt.s32.totalorder %s10, 4
    // Predicated region
    $region21: #{enc_block_forward.3} parent=5 // pred_check
      %p170 = pneg %p169
    $region22: #{enc_block_forward.3} parent=5 // pred_check_branch
      %172 = sbr.rel (%p170) target = $region24
    $region23: #{enc_block_forward.3} parent=5 // pred_region
      // Predicated region
      $region25: #{enc_block_forward.3} parent=23 // pred_check
        %p173 = pneg %p44
      $region26: #{enc_block_forward.3} parent=23 // pred_check_branch
        %175 = sbr.rel (%p173) target = $region28
      $region27: #{enc_block_forward.3} parent=23 // pred_region
        %p176 = scmp.lt.s32.totalorder %s17, 1
        %s177 = scalar_select %p176, %s17, 1
        %p178 = scmp.lt.s32.totalorder %s18, 1
        %s179 = scalar_select %p178, %s18, 1
        %s180 = smul.addr %s177, 2
        %s181 = sadd.s32 %s179, %s180
        %s182 = smul.addr %s181, 8
        %s183 = scalar_lea.vmem %s0, %s182
      $region28: #{enc_block_forward.3} parent=23 // pred_fallthru
        _
      // Predicated region
      $region29: #{enc_block_forward.3} parent=23 // pred_check
        %p184 = pneg %p72
      $region30: #{enc_block_forward.3} parent=23 // pred_check_branch
        %186 = sbr.rel (%p184) target = $region32
      $region31: #{enc_block_forward.3} parent=23 // pred_region
        %p187 = scmp.lt.s32.totalorder %s17, 1
        %s188 = scalar_select %p187, %s17, 1
        %p189 = scmp.lt.s32.totalorder %s18, 1
        %s190 = scalar_select %p189, %s18, 1
        %s191 = smul.addr %s188, 2
        %s192 = sadd.s32 %s190, %s191
        %s193 = smul.addr %s192, 8
        %s194 = scalar_lea.vmem %s1, %s193
      $region32: #{enc_block_forward.3} parent=23 // pred_fallthru
        _
    $region24: #{enc_block_forward.3} parent=5 // pred_fallthru
      _
    %p195 = scmp.le.s32.totalorder 1, %s10
    %p196 = scmp.lt.s32.totalorder %s10, 5
    %p197 = pnand %p195, %p196
    %p198 = pneg %p197
    // Predicated region
    $region33: #{enc_block_forward.3} parent=5 // pred_check
      _
    $region34: #{enc_block_forward.3} parent=5 // pred_check_branch
      %200 = sbr.rel (%p197) target = $region36
    $region35: #{enc_block_forward.3} parent=5 // pred_region
      %s201 = ssub.s32 %s10, 1
      %p202 = scmp.lt.s32.totalorder %s19, 1
      %s203 = scalar_select %p202, %s19, 1
      %p204 = scmp.lt.s32.totalorder %s20, 1
      %s205 = scalar_select %p204, %s20, 1
      %s206 = smul.addr %s203, 2
      %s207 = sadd.s32 %s205, %s206
      %s208 = smul.addr %s207, 8
      %s209 = scalar_lea.vmem %s0, %s208
      %p210 = pneg %p50
      %p211 = pneg %p47
      %p212 = scmp.lt.s32.totalorder %s19, 1
      %s213 = scalar_select %p212, %s19, 1
      %p214 = scmp.lt.s32.totalorder %s20, 1
      %s215 = scalar_select %p214, %s20, 1
      %s216 = smul.addr %s213, 2
      %s217 = sadd.s32 %s215, %s216
      %s218 = smul.addr %s217, 8
      %s219 = scalar_lea.vmem %s1, %s218
      %p220 = pneg %p78
      %p221 = pneg %p75
      %p222 = pneg %p99
      %p223 = pneg %p96
      %p224 = pneg %p120
      %p225 = pneg %p117
      %p226 = pneg %p148
      %p227 = pneg %p145
      %p228 = scmp.lt.s32.totalorder %s19, 1
      %s229 = scalar_select %p228, %s19, 1
      %p230 = scmp.lt.s32.totalorder %s20, 1
      %s231 = scalar_select %p230, %s20, 1
      %s232 = smul.addr %s229, 2
      %s233 = sadd.s32 %s231, %s232
      %s234 = smul.addr %s233, 8
      %s235 = scalar_lea.vmem %s4, %s234
      %p236 = scmp.lt.s32.totalorder %s19, 1
      %s237 = scalar_select %p236, %s19, 1
      %p238 = scmp.lt.s32.totalorder %s20, 1
      %s239 = scalar_select %p238, %s20, 1
      %s240 = smul.addr %s237, 2
      %s241 = sadd.s32 %s239, %s240
      %s242 = smul.addr %s241, 8
      %s243 = scalar_lea.vmem %s0, %s242
      %p244 = scmp.lt.s32.totalorder %s19, 1
      %s245 = scalar_select %p244, %s19, 1
      %p246 = scmp.lt.s32.totalorder %s20, 1
      %s247 = scalar_select %p246, %s20, 1
      %s248 = smul.addr %s245, 2
      %s249 = sadd.s32 %s247, %s248
      %s250 = smul.addr %s249, 8
      %s251 = scalar_lea.vmem %s1, %s250
      %p252 = scmp.lt.s32.totalorder %s19, 1
      %s253 = scalar_select %p252, %s19, 1
      %p254 = scmp.lt.s32.totalorder %s20, 1
      %s255 = scalar_select %p254, %s20, 1
      %s256 = smul.addr %s253, 2
      %s257 = sadd.s32 %s255, %s256
      %s258 = smul.addr %s257, 8
      %s259 = scalar_lea.vmem %s4, %s258
      %v260 = vld [vmem:[%s243] sm:$0xff]
      %vm261 = vcmask 523264
      %262 = vst.msk [vmem:[%s259] sm:$0xff] %vm261, %v260
      %v263 = vld [vmem:[%s251] sm:$0xff]
      %v264 = vld [vmem:[%s2] sm:$0x1]
      %v266 = vlaneseq
      %v267 = vshrl.u32 %v266, 7
      %v268 = vsub.s32 0, %v267
      %v269 = vrot.slane %v264, %v268
      %v271 = vmul.f32 %v263, %v269
      %v272 = vld [vmem:[%s3] sm:$0x1]
      %v274 = vlaneseq
      %v275 = vshrl.u32 %v274, 7
      %v276 = vsub.s32 0, %v275
      %v277 = vrot.slane %v272, %v276
      %v279 = vadd.f32 %v271, %v277
      %281 = vrot.lane.b32.xlu0 %v279, 64
      %v282 = vpop.permute.xlu0 %281
      %vm284 = vcmask 1048064
      %285 = vst.msk [vmem:[%s259] sm:$0xff] %vm284, %v282
      %p286 = scmp.lt.s32.totalorder %s19, 1
      %s287 = scalar_select %p286, %s19, 1
      %p288 = scmp.lt.s32.totalorder %s20, 1
      %s289 = scalar_select %p288, %s20, 1
      %s290 = smul.addr %s287, 2
      %s291 = sadd.s32 %s289, %s290
      %s292 = smul.addr %s291, 8
      %s293 = scalar_lea.vmem %s4, %s292
      // Predicated region
      $region37: #{enc_block_forward.3} parent=35 // pred_check
        %p294 = pneg %p145
      $region38: #{enc_block_forward.3} parent=35 // pred_check_branch
        %296 = sbr.rel (%p294) target = $region40
      $region39: #{enc_block_forward.3} parent=35 // pred_region
        _
      $region40: #{enc_block_forward.3} parent=35 // pred_fallthru
        _
    $region36: #{enc_block_forward.3} parent=5 // pred_fallthru
      _
    %p297 = scmp.le.s32.totalorder 2, %s10
    // Predicated region
    $region41: #{enc_block_forward.3} parent=5 // pred_check
      %p298 = pneg %p297
    $region42: #{enc_block_forward.3} parent=5 // pred_check_branch
      %300 = sbr.rel (%p298) target = $region44
    $region43: #{enc_block_forward.3} parent=5 // pred_region
      %s301 = ssub.s32 %s10, 2
      // Predicated region
      $region45: #{enc_block_forward.3} parent=43 // pred_check
        %p302 = pneg %p151
      $region46: #{enc_block_forward.3} parent=43 // pred_check_branch
        %304 = sbr.rel (%p302) target = $region48
      $region47: #{enc_block_forward.3} parent=43 // pred_region
        %p305 = scmp.lt.s32.totalorder %s21, 1
        %s306 = scalar_select %p305, %s21, 1
        %p307 = scmp.lt.s32.totalorder %s22, 1
        %s308 = scalar_select %p307, %s22, 1
        %s309 = smul.addr %s306, 2
        %s310 = sadd.s32 %s308, %s309
        %s311 = smul.addr %s310, 8
        %s312 = scalar_lea.vmem %s4, %s311
      $region48: #{enc_block_forward.3} parent=43 // pred_fallthru
        _
    $region44: #{enc_block_forward.3} parent=5 // pred_fallthru
      _
  $region6: #{enc_block_forward.3} parent=0 // loop_footer
    %s14 = sadd.s32 1, %s10
  $region7: #{enc_block_forward.3} parent=0 // loop_footer_branch
    %9 = sbr.rel target = $region3
  $region8: #{enc_block_forward.3} parent=0 // loop_exit
    _

</llo_original>
